<compile_context>
chip_gen: v7x
topology: tpu7x:2x2x1
jax: 0.10.0
libtpu: 0.0.40
codegen_flags: <defaults>
</compile_context>

<pallas_src>
import jax
import jax.numpy as jnp
from jax.experimental import pallas as pl
from jax.experimental.pallas import tpu as pltpu

# ---------------- model hyper-parameters (small, deterministic) ----------------
WIN = 64        # analysis window length (samples)
HOP = 32        # hop size (samples), HOP = WIN // 2
N_FRAMES = 32   # number of frames per utterance
N_MELS = 32     # feature dimension
HIDDEN = 64     # TDNN hidden dimension
EMB_DIM = 32    # embedding dimension
T = WIN + (N_FRAMES - 1) * HOP   # waveform length = 1056 = (N_FRAMES + 1) * HOP
EPS = 1e-6


def _embedding_kernel(frames_ref, wf_ref, w1_ref, b1_ref, w2m_ref, w2s_ref, b2_ref,
                      out_ref):
    """One grid step == TB utterances.

    frames_ref : (TB, N_FRAMES, WIN)  framed waveform block (f32)
    wf_ref     : (WIN, N_MELS)        window-scaled feature projection (bf16)
    w1_ref     : (N_MELS, HIDDEN)     TDNN pointwise linear (bf16)
    b1_ref     : (1, HIDDEN)          f32
    w2m_ref    : (HIDDEN, EMB_DIM)    post-pooling linear, mean half (bf16)
    w2s_ref    : (HIDDEN, EMB_DIM)    post-pooling linear, std half (bf16)
    b2_ref     : (1, EMB_DIM)         f32
    out_ref    : (TB, 1, EMB_DIM)     embeddings for this block
    """
    tb = frames_ref.shape[0]

    # --- compute_features: (windowed frames) @ proj -> log energy -----------------
    # Window already folded into wf:  (F (*) w) @ W == F @ (w^T (*) W)
    x = frames_ref[...].reshape(tb * N_FRAMES, WIN).astype(jnp.bfloat16)
    proj = jnp.dot(x, wf_ref[...], preferred_element_type=jnp.float32)  # (tb*N, M) f32
    feats = jnp.log(proj * proj + EPS)

    # --- mean_var_norm: per-utterance normalization over the time axis ------------
    f3 = feats.reshape(tb, N_FRAMES, N_MELS)
    mu = jnp.mean(f3, axis=1, keepdims=True)                     # (tb, 1, M)
    var = jnp.mean((f3 - mu) ** 2, axis=1, keepdims=True)        # (tb, 1, M)
    f3 = (f3 - mu) * jax.lax.rsqrt(var + EPS)                    # EUP rsqrt

    # --- embedding_model: TDNN layer + statistics pooling + linear head -----------
    h = jnp.dot(f3.reshape(tb * N_FRAMES, N_MELS).astype(jnp.bfloat16), w1_ref[...],
                preferred_element_type=jnp.float32) + b1_ref[...]
    h = jnp.maximum(h, 0.0)                                      # (tb*N, HIDDEN)

    h3 = h.reshape(tb, N_FRAMES, HIDDEN)
    h_mu = jnp.mean(h3, axis=1, keepdims=True)                   # (tb, 1, H)
    h_var = jnp.mean((h3 - h_mu) ** 2, axis=1, keepdims=True)
    h_std = jnp.sqrt(h_var + EPS)

    stats_mean = h_mu.reshape(tb, HIDDEN).astype(jnp.bfloat16)
    stats_std = h_std.reshape(tb, HIDDEN).astype(jnp.bfloat16)

    # split head avoids a lane-axis concatenate: [mean||std] @ w2 == mean@w2m + std@w2s
    emb = (jnp.dot(stats_mean, w2m_ref[...], preferred_element_type=jnp.float32)
           + jnp.dot(stats_std, w2s_ref[...], preferred_element_type=jnp.float32)
           + b2_ref[...])                                        # (tb, EMB_DIM)

    out_ref[...] = emb.reshape(tb, 1, EMB_DIM).astype(out_ref.dtype)


def embedding_forward(wavs, params, tb=8):
    """wavs: (B, T) float32 waveform. Returns embeddings (B, 1, EMB_DIM)."""
    if wavs.ndim == 1:                       # mirrors wavs.unsqueeze(0)
        wavs = wavs[None, :]
    wavs = wavs.astype(jnp.float32)
    B = wavs.shape[0]
    # TODO(synk): wav_lens is assumed all-ones (full utterances); relative-length
    # masking inside mean_var_norm / pooling is not implemented.

    # Framing without a gather: HOP == WIN // 2, so every frame is two consecutive
    # HOP-sized chunks.
    chunks = wavs.reshape(B, T // HOP, HOP)                       # (B, 33, HOP)
    frames = jnp.concatenate(
        [chunks[:, :N_FRAMES], chunks[:, 1:N_FRAMES + 1]], axis=-1)  # (B, N_FRAMES, WIN)

    # Batch blocking: TB utterances per grid step (pad B up to a multiple of TB).
    tb = max(1, min(tb, B))
    n_blocks = pl.cdiv(B, tb)
    b_pad = n_blocks * tb
    if b_pad != B:
        frames = jnp.pad(frames, ((0, b_pad - B), (0, 0), (0, 0)))

    wf, w1, b1, w2m, w2s, b2 = (params[k] for k in
                                ("wf", "w1", "b1", "w2m", "w2s", "b2"))

    const2 = lambda b: (0, 0)
    grid_spec = pltpu.PrefetchScalarGridSpec(
        num_scalar_prefetch=0,
        grid=(n_blocks,),
        in_specs=[
            pl.BlockSpec((tb, N_FRAMES, WIN), lambda b: (b, 0, 0)),
            pl.BlockSpec((WIN, N_MELS), const2),
            pl.BlockSpec((N_MELS, HIDDEN), const2),
            pl.BlockSpec((1, HIDDEN), const2),
            pl.BlockSpec((HIDDEN, EMB_DIM), const2),
            pl.BlockSpec((HIDDEN, EMB_DIM), const2),
            pl.BlockSpec((1, EMB_DIM), const2),
        ],
        out_specs=pl.BlockSpec((tb, 1, EMB_DIM), lambda b: (b, 0, 0)),
    )

    out = pl.pallas_call(
        _embedding_kernel,
        out_shape=jax.ShapeDtypeStruct((b_pad, 1, EMB_DIM), jnp.float32),
        grid_spec=grid_spec,
        compiler_params=pltpu.CompilerParams(
            dimension_semantics=("parallel",)),
    )(frames, wf, w1, b1, w2m, w2s, b2)
    return out[:B]


def init_params():
    """Deterministic parameter init (synthetic weights, no checkpoint)."""
    key = jax.random.PRNGKey(0)
    k_wf, k_w1, k_b1, k_w2, k_b2 = jax.random.split(key, 5)
    n = jnp.arange(WIN, dtype=jnp.float32)
    hamming = 0.54 - 0.46 * jnp.cos(2.0 * jnp.pi * n / (WIN - 1))
    wf = jax.random.normal(k_wf, (WIN, N_MELS), jnp.float32) * 0.1
    w2 = jax.random.normal(k_w2, (2 * HIDDEN, EMB_DIM), jnp.float32) * 0.1
    return {
        # Hamming window folded into the feature projection; bf16 for the MXU.
        "wf": (hamming[:, None] * wf).astype(jnp.bfloat16),                    # (WIN, N_MELS)
        "w1": (jax.random.normal(k_w1, (N_MELS, HIDDEN), jnp.float32) * 0.1
               ).astype(jnp.bfloat16),
        "b1": jax.random.normal(k_b1, (1, HIDDEN), jnp.float32) * 0.01,
        "w2m": w2[:HIDDEN].astype(jnp.bfloat16),                               # mean half
        "w2s": w2[HIDDEN:].astype(jnp.bfloat16),                               # std half
        "b2": jax.random.normal(k_b2, (1, EMB_DIM), jnp.float32) * 0.01,
    }


if __name__ == "__main__":
    params = init_params()
    key = jax.random.PRNGKey(0)
    B = 16
    wavs = jax.random.normal(key, (B, T), jnp.float32)   # (B, T=1056) waveform
    emb = embedding_forward(wavs, params, tb=8)          # 2 grid steps -> both v7x TCs
    jax.block_until_ready(emb)
    assert emb.shape == (B, 1, EMB_DIM), emb.shape
    assert bool(jnp.all(jnp.isfinite(emb)))
    print("KERNEL_OK")
</pallas_src>

<mosaic_0001>
module attributes {stable_mosaic.version = 11 : i64} {
  func.func @_embedding_kernel(%arg0: i32, %arg1: memref<8x32x64xf32, #tpu.memory_space<vmem>>, %arg2: memref<64x32xbf16, #tpu.memory_space<vmem>>, %arg3: memref<32x64xbf16, #tpu.memory_space<vmem>>, %arg4: memref<1x64xf32, #tpu.memory_space<vmem>>, %arg5: memref<64x32xbf16, #tpu.memory_space<vmem>>, %arg6: memref<64x32xbf16, #tpu.memory_space<vmem>>, %arg7: memref<1x32xf32, #tpu.memory_space<vmem>>, %arg8: memref<8x1x32xf32, #tpu.memory_space<vmem>>) attributes {dimension_semantics = [#tpu.dimension_semantics<parallel>], iteration_bounds = array<i64: 2>, scalar_prefetch = 0 : i64, scratch_operands = 0 : i64, tpu.core_type = #tpu.core_type<tc>, window_params = [{transform_indices = @transform_0, window_bounds = array<i64: 8, 32, 64>}, {pipeline_mode = #tpu.pipeline_mode<synchronous>, transform_indices = @transform_1, window_bounds = array<i64: 64, 32>}, {pipeline_mode = #tpu.pipeline_mode<synchronous>, transform_indices = @transform_2, window_bounds = array<i64: 32, 64>}, {pipeline_mode = #tpu.pipeline_mode<synchronous>, transform_indices = @transform_3, window_bounds = array<i64: 1, 64>}, {pipeline_mode = #tpu.pipeline_mode<synchronous>, transform_indices = @transform_4, window_bounds = array<i64: 64, 32>}, {pipeline_mode = #tpu.pipeline_mode<synchronous>, transform_indices = @transform_5, window_bounds = array<i64: 64, 32>}, {pipeline_mode = #tpu.pipeline_mode<synchronous>, transform_indices = @transform_6, window_bounds = array<i64: 1, 32>}, {transform_indices = @transform_7, window_bounds = array<i64: 8, 1, 32>}]} {
    %c0 = arith.constant 0 : index
    %c0_0 = arith.constant 0 : index
    %c0_1 = arith.constant 0 : index
    %0 = vector.load %arg1[%c0, %c0_0, %c0_1] : memref<8x32x64xf32, #tpu.memory_space<vmem>>, vector<8x32x64xf32>
    %1 = vector.shape_cast %0 : vector<8x32x64xf32> to vector<256x64xf32>
    %2 = arith.truncf %1 : vector<256x64xf32> to vector<256x64xbf16>
    %c0_2 = arith.constant 0 : index
    %c0_3 = arith.constant 0 : index
    %3 = vector.load %arg2[%c0_2, %c0_3] : memref<64x32xbf16, #tpu.memory_space<vmem>>, vector<64x32xbf16>
    %cst = arith.constant dense<0.000000e+00> : vector<256x32xf32>
    %4 = tpu.matmul %2, %3, %cst {dimension_numbers = #tpu.dot_dimension_numbers<[1], [0], [0], [1], [0, 0, 1, 1], [], []>} : vector<256x64xbf16>, vector<64x32xbf16>, vector<256x32xf32> -> vector<256x32xf32>
    %5 = arith.mulf %4, %4 : vector<256x32xf32>
    %cst_4 = arith.constant 9.99999997E-7 : f32
    %6 = vector.broadcast %cst_4 : f32 to vector<256x32xf32>
    %7 = arith.addf %5, %6 : vector<256x32xf32>
    %8 = math.log %7 : vector<256x32xf32>
    %9 = vector.shape_cast %8 : vector<256x32xf32> to vector<8x32x32xf32>
    %cst_5 = arith.constant dense<0.000000e+00> : vector<8x32xf32>
    %10 = vector.multi_reduction <add>, %9, %cst_5 [1] : vector<8x32x32xf32> to vector<8x32xf32>
    %11 = vector.shape_cast %10 : vector<8x32xf32> to vector<8x1x32xf32>
    %cst_6 = arith.constant 3.200000e+01 : f32
    %12 = vector.broadcast %cst_6 : f32 to vector<8x1x32xf32>
    %13 = arith.divf %11, %12 : vector<8x1x32xf32>
    %14 = vector.broadcast %13 : vector<8x1x32xf32> to vector<8x32x32xf32>
    %15 = arith.subf %9, %14 : vector<8x32x32xf32>
    %16 = arith.mulf %15, %15 : vector<8x32x32xf32>
    %cst_7 = arith.constant dense<0.000000e+00> : vector<8x32xf32>
    %17 = vector.multi_reduction <add>, %16, %cst_7 [1] : vector<8x32x32xf32> to vector<8x32xf32>
    %18 = vector.shape_cast %17 : vector<8x32xf32> to vector<8x1x32xf32>
    %cst_8 = arith.constant 3.200000e+01 : f32
    %19 = vector.broadcast %cst_8 : f32 to vector<8x1x32xf32>
    %20 = arith.divf %18, %19 : vector<8x1x32xf32>
    %21 = vector.broadcast %13 : vector<8x1x32xf32> to vector<8x32x32xf32>
    %22 = arith.subf %9, %21 : vector<8x32x32xf32>
    %cst_9 = arith.constant 9.99999997E-7 : f32
    %23 = vector.broadcast %cst_9 : f32 to vector<8x1x32xf32>
    %24 = arith.addf %20, %23 : vector<8x1x32xf32>
    %25 = math.rsqrt %24 : vector<8x1x32xf32>
    %26 = vector.broadcast %25 : vector<8x1x32xf32> to vector<8x32x32xf32>
    %27 = arith.mulf %22, %26 : vector<8x32x32xf32>
    %28 = vector.shape_cast %27 : vector<8x32x32xf32> to vector<256x32xf32>
    %29 = arith.truncf %28 : vector<256x32xf32> to vector<256x32xbf16>
    %c0_10 = arith.constant 0 : index
    %c0_11 = arith.constant 0 : index
    %30 = vector.load %arg3[%c0_10, %c0_11] : memref<32x64xbf16, #tpu.memory_space<vmem>>, vector<32x64xbf16>
    %cst_12 = arith.constant dense<0.000000e+00> : vector<256x64xf32>
    %31 = tpu.matmul %29, %30, %cst_12 {dimension_numbers = #tpu.dot_dimension_numbers<[1], [0], [0], [1], [0, 0, 1, 1], [], []>} : vector<256x32xbf16>, vector<32x64xbf16>, vector<256x64xf32> -> vector<256x64xf32>
    %c0_13 = arith.constant 0 : index
    %c0_14 = arith.constant 0 : index
    %32 = vector.load %arg4[%c0_13, %c0_14] : memref<1x64xf32, #tpu.memory_space<vmem>>, vector<1x64xf32>
    %33 = vector.broadcast %32 : vector<1x64xf32> to vector<256x64xf32>
    %34 = arith.addf %31, %33 : vector<256x64xf32>
    %cst_15 = arith.constant 0.000000e+00 : f32
    %35 = vector.broadcast %cst_15 : f32 to vector<256x64xf32>
    %36 = arith.maximumf %34, %35 : vector<256x64xf32>
    %37 = vector.shape_cast %36 : vector<256x64xf32> to vector<8x32x64xf32>
    %cst_16 = arith.constant dense<0.000000e+00> : vector<8x64xf32>
    %38 = vector.multi_reduction <add>, %37, %cst_16 [1] : vector<8x32x64xf32> to vector<8x64xf32>
    %39 = vector.shape_cast %38 : vector<8x64xf32> to vector<8x1x64xf32>
    %cst_17 = arith.constant 3.200000e+01 : f32
    %40 = vector.broadcast %cst_17 : f32 to vector<8x1x64xf32>
    %41 = arith.divf %39, %40 : vector<8x1x64xf32>
    %42 = vector.broadcast %41 : vector<8x1x64xf32> to vector<8x32x64xf32>
    %43 = arith.subf %37, %42 : vector<8x32x64xf32>
    %44 = arith.mulf %43, %43 : vector<8x32x64xf32>
    %cst_18 = arith.constant dense<0.000000e+00> : vector<8x64xf32>
    %45 = vector.multi_reduction <add>, %44, %cst_18 [1] : vector<8x32x64xf32> to vector<8x64xf32>
    %46 = vector.shape_cast %45 : vector<8x64xf32> to vector<8x1x64xf32>
    %cst_19 = arith.constant 3.200000e+01 : f32
    %47 = vector.broadcast %cst_19 : f32 to vector<8x1x64xf32>
    %48 = arith.divf %46, %47 : vector<8x1x64xf32>
    %cst_20 = arith.constant 9.99999997E-7 : f32
    %49 = vector.broadcast %cst_20 : f32 to vector<8x1x64xf32>
    %50 = arith.addf %48, %49 : vector<8x1x64xf32>
    %51 = math.sqrt %50 : vector<8x1x64xf32>
    %52 = vector.shape_cast %41 : vector<8x1x64xf32> to vector<8x64xf32>
    %53 = arith.truncf %52 : vector<8x64xf32> to vector<8x64xbf16>
    %54 = vector.shape_cast %51 : vector<8x1x64xf32> to vector<8x64xf32>
    %55 = arith.truncf %54 : vector<8x64xf32> to vector<8x64xbf16>
    %c0_21 = arith.constant 0 : index
    %c0_22 = arith.constant 0 : index
    %56 = vector.load %arg5[%c0_21, %c0_22] : memref<64x32xbf16, #tpu.memory_space<vmem>>, vector<64x32xbf16>
    %cst_23 = arith.constant dense<0.000000e+00> : vector<8x32xf32>
    %57 = tpu.matmul %53, %56, %cst_23 {dimension_numbers = #tpu.dot_dimension_numbers<[1], [0], [0], [1], [0, 0, 1, 1], [], []>} : vector<8x64xbf16>, vector<64x32xbf16>, vector<8x32xf32> -> vector<8x32xf32>
    %c0_24 = arith.constant 0 : index
    %c0_25 = arith.constant 0 : index
    %58 = vector.load %arg6[%c0_24, %c0_25] : memref<64x32xbf16, #tpu.memory_space<vmem>>, vector<64x32xbf16>
    %cst_26 = arith.constant dense<0.000000e+00> : vector<8x32xf32>
    %59 = tpu.matmul %55, %58, %cst_26 {dimension_numbers = #tpu.dot_dimension_numbers<[1], [0], [0], [1], [0, 0, 1, 1], [], []>} : vector<8x64xbf16>, vector<64x32xbf16>, vector<8x32xf32> -> vector<8x32xf32>
    %60 = arith.addf %57, %59 : vector<8x32xf32>
    %c0_27 = arith.constant 0 : index
    %c0_28 = arith.constant 0 : index
    %61 = vector.load %arg7[%c0_27, %c0_28] : memref<1x32xf32, #tpu.memory_space<vmem>>, vector<1x32xf32>
    %62 = vector.broadcast %61 : vector<1x32xf32> to vector<8x32xf32>
    %63 = arith.addf %60, %62 : vector<8x32xf32>
    %64 = vector.shape_cast %63 : vector<8x32xf32> to vector<8x1x32xf32>
    %c0_29 = arith.constant 0 : index
    %c0_30 = arith.constant 0 : index
    %c0_31 = arith.constant 0 : index
    %65 = vector.load %arg8[%c0_29, %c0_30, %c0_31] : memref<8x1x32xf32, #tpu.memory_space<vmem>>, vector<8x1x32xf32>
    tpu.vector_store %arg8[%c0_29, %c0_30, %c0_31], %64 {strides = array<i32>} : memref<8x1x32xf32, #tpu.memory_space<vmem>>, vector<8x1x32xf32>,
    return
  }
  func.func @transform_0(%arg0: i32) -> (i32, i32, i32) {
    %c0_i32 = arith.constant 0 : i32
    %c0_i32_0 = arith.constant 0 : i32
    %c0_i32_1 = arith.constant 0 : i32
    return %arg0, %c0_i32, %c0_i32_0 : i32, i32, i32
  }
  func.func @transform_1(%arg0: i32) -> (i32, i32) {
    %c0_i32 = arith.constant 0 : i32
    %c0_i32_0 = arith.constant 0 : i32
    %c0_i32_1 = arith.constant 0 : i32
    return %c0_i32, %c0_i32_0 : i32, i32
  }
  func.func @transform_2(%arg0: i32) -> (i32, i32) {
    %c0_i32 = arith.constant 0 : i32
    %c0_i32_0 = arith.constant 0 : i32
    %c0_i32_1 = arith.constant 0 : i32
    return %c0_i32, %c0_i32_0 : i32, i32
  }
  func.func @transform_3(%arg0: i32) -> (i32, i32) {
    %c0_i32 = arith.constant 0 : i32
    %c0_i32_0 = arith.constant 0 : i32
    %c0_i32_1 = arith.constant 0 : i32
    return %c0_i32, %c0_i32_0 : i32, i32
  }
  func.func @transform_4(%arg0: i32) -> (i32, i32) {
    %c0_i32 = arith.constant 0 : i32
    %c0_i32_0 = arith.constant 0 : i32
    %c0_i32_1 = arith.constant 0 : i32
    return %c0_i32, %c0_i32_0 : i32, i32
  }
  func.func @transform_5(%arg0: i32) -> (i32, i32) {
    %c0_i32 = arith.constant 0 : i32
    %c0_i32_0 = arith.constant 0 : i32
    %c0_i32_1 = arith.constant 0 : i32
    return %c0_i32, %c0_i32_0 : i32, i32
  }
  func.func @transform_6(%arg0: i32) -> (i32, i32) {
    %c0_i32 = arith.constant 0 : i32
    %c0_i32_0 = arith.constant 0 : i32
    %c0_i32_1 = arith.constant 0 : i32
    return %c0_i32, %c0_i32_0 : i32, i32
  }
  func.func @transform_7(%arg0: i32) -> (i32, i32, i32) {
    %c0_i32 = arith.constant 0 : i32
    %c0_i32_0 = arith.constant 0 : i32
    %c0_i32_1 = arith.constant 0 : i32
    return %arg0, %c0_i32, %c0_i32_0 : i32, i32, i32
  }
}

</mosaic_0001>

<llo_original>
// kernel: tpu_custom_call.1
$region0: #{tpu_custom_call.1}
  #allocation0 [shape = 'u32[]', space=smem, size = 0x4, offset = 0x4, fixed_abs, tag = 'smem constant byte address 0x4 - core index']
  #allocation1 [shape = 'u32[144,128]{1,0:T(1,128)}', space=vmem, size = 0x12000, scoped, tag = 'internal scratch']
  %s0 = inlined_call_operand.hbm [shape: f32[16,32,64], index: 0, kind: input, shape index: {}]
  %s1 = inlined_call_operand.vmem [shape: bf16[64,32], index: 1, kind: input, shape index: {}]
  %s2 = inlined_call_operand.vmem [shape: bf16[32,64], index: 2, kind: input, shape index: {}]
  %s3 = inlined_call_operand.vmem [shape: f32[1,64], index: 3, kind: input, shape index: {}]
  %s4 = inlined_call_operand.vmem [shape: bf16[64,32], index: 4, kind: input, shape index: {}]
  %s5 = inlined_call_operand.vmem [shape: bf16[64,32], index: 5, kind: input, shape index: {}]
  %s6 = inlined_call_operand.vmem [shape: f32[1,32], index: 6, kind: input, shape index: {}]
  %s7 = inlined_call_operand.hbm [shape: f32[16,1,32], index: 7, kind: output, shape index: {}]
  %s8 = sld [smem:[#allocation0]]
  $region65: #{tpu_custom_call.1} parent=0
    _
  %s10 = ssub.s32 1, %s8
  %s11 = scalar_select 0, %s10, %s8
  $region1: #{tpu_custom_call.1} parent=0
    #allocation2 [shape = 'u8[262144]{0}', space=vmem, size = 0x40000, scoped, tag = 'input window, operand 0']
    #allocation3 [shape = 's32[2]{0}', space=sflag, size = 0x8, scoped, tag = 'scoped memory for tpu_custom_call.1']
    #allocation4 [shape = 's32[2]{0}', space=sflag, size = 0x8, scoped, tag = 'scoped memory for tpu_custom_call.1']
    #allocation5 [shape = 'u8[8192]{0}', space=vmem, size = 0x2000, scoped, tag = 'output window, operand 0']
    %12 = vsyncpa [#allocation3], 0
    %s13 = scalar_lea.sflag [#allocation3], 1
    %14 = vsyncpa %s13, 0
    %15 = vsyncpa [#allocation4], 0
    %s16 = scalar_lea.sflag [#allocation4], 1
    %17 = vsyncpa %s16, 0
    loop: start=0, step=1, limit=4
    $region2: #{tpu_custom_call.1} parent=1 // loop_pre_header
      _
    $region3: #{tpu_custom_call.1} parent=1 // loop_header
      %s19 = sphi 0, %s23
      %p20 = scmp.ge.s32.totalorder %s19, 4
      %s29 = sphi 0, %s31
      %s32 = sphi 0, %s29
      %s33 = sphi 0, %s32
      %s49 = sphi 0, %s33
      %s53 = sphi 0, %s53
      %s55 = sphi 0, %s53
      %s56 = sphi 0, %s55
      %s70 = sphi 0, %s56
      %s74 = sphi 0, %s74
      %s76 = sphi 0, %s74
      %s77 = sphi 0, %s76
      %s91 = sphi 0, %s77
      %s95 = sphi 0, %s95
      %s97 = sphi 0, %s95
      %s98 = sphi 0, %s97
      %s112 = sphi 0, %s98
      %s116 = sphi 0, %s116
      %s118 = sphi 0, %s116
      %s119 = sphi 0, %s118
      %s133 = sphi 0, %s119
      %s137 = sphi 0, %s137
      %s139 = sphi 0, %s137
      %s140 = sphi 0, %s139
      %s154 = sphi 0, %s140
      %s158 = sphi 0, %s158
      %s160 = sphi 0, %s158
      %s161 = sphi 0, %s160
      %s175 = sphi 0, %s161
      %s181 = sphi 0, %s183
      %s184 = sphi 0, %s181
      %s185 = sphi 0, %s184
      %s201 = sphi 0, %s185
    $region4: #{tpu_custom_call.1} parent=1 // loop_header_branch
      %22 = sbr.rel (%p20) target = $region8
    $region5: #{tpu_custom_call.1} parent=1 // loop_body
      %s24 = ssub.s32 %s19, 1
      %s25 = ssub.s32 %s19, 2
      %s26 = sadd.s32 %s19, 1
      %s27 = ssub.s32 %s19, %s26
      %p28 = scmp.eq.s32.totalorder %s27, 0
      %s30 = sadd.s32 %s29, 1
      %s31 = scalar_select %p28, %s29, %s30
      %p34 = pneg %p28
      %p35 = scmp.eq.s32.totalorder %s19, 1
      %p36 = por %p34, %p35
      %p37 = scmp.ne.s32.totalorder %s29, %s32
      %p38 = scmp.eq.s32.totalorder %s19, 0
      %p39 = por %p37, %p38
      %p40 = scmp.ne.s32.totalorder %s29, %s32
      %p41 = scmp.eq.s32.totalorder %s24, 1
      %p42 = por %p40, %p41
      %p43 = scmp.ne.s32.totalorder %s32, %s33
      %p44 = scmp.eq.s32.totalorder %s24, 0
      %p45 = por %p43, %p44
      %p46 = scmp.ne.s32.totalorder %s32, %s33
      %p47 = scmp.eq.s32.totalorder %s25, 1
      %p48 = por %p46, %p47
      %p50 = scmp.ne.s32.totalorder %s33, %s49
      %p51 = scmp.eq.s32.totalorder %s25, 0
      %p52 = por %p50, %p51
      %s54 = sadd.s32 %s53, 1
      %p57 = scmp.eq.s32.totalorder %s19, 1
      %p58 = scmp.ne.s32.totalorder %s53, %s55
      %p59 = scmp.eq.s32.totalorder %s19, 0
      %p60 = por %p58, %p59
      %p61 = scmp.ne.s32.totalorder %s53, %s55
      %p62 = scmp.eq.s32.totalorder %s24, 1
      %p63 = por %p61, %p62
      %p64 = scmp.ne.s32.totalorder %s55, %s56
      %p65 = scmp.eq.s32.totalorder %s24, 0
      %p66 = por %p64, %p65
      %p67 = scmp.ne.s32.totalorder %s55, %s56
      %p68 = scmp.eq.s32.totalorder %s25, 1
      %p69 = por %p67, %p68
      %p71 = scmp.ne.s32.totalorder %s56, %s70
      %p72 = scmp.eq.s32.totalorder %s25, 0
      %p73 = por %p71, %p72
      %s75 = sadd.s32 %s74, 1
      %p78 = scmp.eq.s32.totalorder %s19, 1
      %p79 = scmp.ne.s32.totalorder %s74, %s76
      %p80 = scmp.eq.s32.totalorder %s19, 0
      %p81 = por %p79, %p80
      %p82 = scmp.ne.s32.totalorder %s74, %s76
      %p83 = scmp.eq.s32.totalorder %s24, 1
      %p84 = por %p82, %p83
      %p85 = scmp.ne.s32.totalorder %s76, %s77
      %p86 = scmp.eq.s32.totalorder %s24, 0
      %p87 = por %p85, %p86
      %p88 = scmp.ne.s32.totalorder %s76, %s77
      %p89 = scmp.eq.s32.totalorder %s25, 1
      %p90 = por %p88, %p89
      %p92 = scmp.ne.s32.totalorder %s77, %s91
      %p93 = scmp.eq.s32.totalorder %s25, 0
      %p94 = por %p92, %p93
      %s96 = sadd.s32 %s95, 1
      %p99 = scmp.eq.s32.totalorder %s19, 1
      %p100 = scmp.ne.s32.totalorder %s95, %s97
      %p101 = scmp.eq.s32.totalorder %s19, 0
      %p102 = por %p100, %p101
      %p103 = scmp.ne.s32.totalorder %s95, %s97
      %p104 = scmp.eq.s32.totalorder %s24, 1
      %p105 = por %p103, %p104
      %p106 = scmp.ne.s32.totalorder %s97, %s98
      %p107 = scmp.eq.s32.totalorder %s24, 0
      %p108 = por %p106, %p107
      %p109 = scmp.ne.s32.totalorder %s97, %s98
      %p110 = scmp.eq.s32.totalorder %s25, 1
      %p111 = por %p109, %p110
      %p113 = scmp.ne.s32.totalorder %s98, %s112
      %p114 = scmp.eq.s32.totalorder %s25, 0
      %p115 = por %p113, %p114
      %s117 = sadd.s32 %s116, 1
      %p120 = scmp.eq.s32.totalorder %s19, 1
      %p121 = scmp.ne.s32.totalorder %s116, %s118
      %p122 = scmp.eq.s32.totalorder %s19, 0
      %p123 = por %p121, %p122
      %p124 = scmp.ne.s32.totalorder %s116, %s118
      %p125 = scmp.eq.s32.totalorder %s24, 1
      %p126 = por %p124, %p125
      %p127 = scmp.ne.s32.totalorder %s118, %s119
      %p128 = scmp.eq.s32.totalorder %s24, 0
      %p129 = por %p127, %p128
      %p130 = scmp.ne.s32.totalorder %s118, %s119
      %p131 = scmp.eq.s32.totalorder %s25, 1
      %p132 = por %p130, %p131
      %p134 = scmp.ne.s32.totalorder %s119, %s133
      %p135 = scmp.eq.s32.totalorder %s25, 0
      %p136 = por %p134, %p135
      %s138 = sadd.s32 %s137, 1
      %p141 = scmp.eq.s32.totalorder %s19, 1
      %p142 = scmp.ne.s32.totalorder %s137, %s139
      %p143 = scmp.eq.s32.totalorder %s19, 0
      %p144 = por %p142, %p143
      %p145 = scmp.ne.s32.totalorder %s137, %s139
      %p146 = scmp.eq.s32.totalorder %s24, 1
      %p147 = por %p145, %p146
      %p148 = scmp.ne.s32.totalorder %s139, %s140
      %p149 = scmp.eq.s32.totalorder %s24, 0
      %p150 = por %p148, %p149
      %p151 = scmp.ne.s32.totalorder %s139, %s140
      %p152 = scmp.eq.s32.totalorder %s25, 1
      %p153 = por %p151, %p152
      %p155 = scmp.ne.s32.totalorder %s140, %s154
      %p156 = scmp.eq.s32.totalorder %s25, 0
      %p157 = por %p155, %p156
      %s159 = sadd.s32 %s158, 1
      %p162 = scmp.eq.s32.totalorder %s19, 1
      %p163 = scmp.ne.s32.totalorder %s158, %s160
      %p164 = scmp.eq.s32.totalorder %s19, 0
      %p165 = por %p163, %p164
      %p166 = scmp.ne.s32.totalorder %s158, %s160
      %p167 = scmp.eq.s32.totalorder %s24, 1
      %p168 = por %p166, %p167
      %p169 = scmp.ne.s32.totalorder %s160, %s161
      %p170 = scmp.eq.s32.totalorder %s24, 0
      %p171 = por %p169, %p170
      %p172 = scmp.ne.s32.totalorder %s160, %s161
      %p173 = scmp.eq.s32.totalorder %s25, 1
      %p174 = por %p172, %p173
      %p176 = scmp.ne.s32.totalorder %s161, %s175
      %p177 = scmp.eq.s32.totalorder %s25, 0
      %p178 = por %p176, %p177
      %s179 = ssub.s32 %s19, %s26
      %p180 = scmp.eq.s32.totalorder %s179, 0
      %s182 = sadd.s32 %s181, 1
      %s183 = scalar_select %p180, %s181, %s182
      %p186 = pneg %p180
      %p187 = scmp.eq.s32.totalorder %s19, 1
      %p188 = por %p186, %p187
      %p189 = scmp.ne.s32.totalorder %s181, %s184
      %p190 = scmp.eq.s32.totalorder %s19, 0
      %p191 = por %p189, %p190
      %p192 = scmp.ne.s32.totalorder %s181, %s184
      %p193 = scmp.eq.s32.totalorder %s24, 1
      %p194 = por %p192, %p193
      %p195 = scmp.ne.s32.totalorder %s184, %s185
      %p196 = scmp.eq.s32.totalorder %s24, 0
      %p197 = por %p195, %p196
      %p198 = scmp.ne.s32.totalorder %s184, %s185
      %p199 = scmp.eq.s32.totalorder %s25, 1
      %p200 = por %p198, %p199
      %p202 = scmp.ne.s32.totalorder %s185, %s201
      %p203 = scmp.eq.s32.totalorder %s25, 0
      %p204 = por %p202, %p203
      %p205 = scmp.le.s32.totalorder 1, %s19
      %p206 = scmp.lt.s32.totalorder %s19, 3
      %p207 = pnand %p205, %p206
      %p208 = pneg %p207
      // Predicated region
      $region9: #{tpu_custom_call.1} parent=5 // pred_check
        _
      $region10: #{tpu_custom_call.1} parent=5 // pred_check_branch
        %210 = sbr.rel (%p207) target = $region12
      $region11: #{tpu_custom_call.1} parent=5 // pred_region
        %s211 = ssub.s32 %s19, 1
        // Predicated region
        $region13: #{tpu_custom_call.1} parent=11 // pred_check
          %p212 = pneg %p66
        $region14: #{tpu_custom_call.1} parent=11 // pred_check_branch
          %214 = sbr.rel (%p212) target = $region16
        $region15: #{tpu_custom_call.1} parent=11 // pred_region
          _
        $region16: #{tpu_custom_call.1} parent=11 // pred_fallthru
          _
        // Predicated region
        $region17: #{tpu_custom_call.1} parent=11 // pred_check
          %p215 = pneg %p87
        $region18: #{tpu_custom_call.1} parent=11 // pred_check_branch
          %217 = sbr.rel (%p215) target = $region20
        $region19: #{tpu_custom_call.1} parent=11 // pred_region
          _
        $region20: #{tpu_custom_call.1} parent=11 // pred_fallthru
          _
        // Predicated region
        $region21: #{tpu_custom_call.1} parent=11 // pred_check
          %p218 = pneg %p108
        $region22: #{tpu_custom_call.1} parent=11 // pred_check_branch
          %220 = sbr.rel (%p218) target = $region24
        $region23: #{tpu_custom_call.1} parent=11 // pred_region
          _
        $region24: #{tpu_custom_call.1} parent=11 // pred_fallthru
          _
        // Predicated region
        $region25: #{tpu_custom_call.1} parent=11 // pred_check
          %p221 = pneg %p129
        $region26: #{tpu_custom_call.1} parent=11 // pred_check_branch
          %223 = sbr.rel (%p221) target = $region28
        $region27: #{tpu_custom_call.1} parent=11 // pred_region
          _
        $region28: #{tpu_custom_call.1} parent=11 // pred_fallthru
          _
        // Predicated region
        $region29: #{tpu_custom_call.1} parent=11 // pred_check
          %p224 = pneg %p150
        $region30: #{tpu_custom_call.1} parent=11 // pred_check_branch
          %226 = sbr.rel (%p224) target = $region32
        $region31: #{tpu_custom_call.1} parent=11 // pred_region
          _
        $region32: #{tpu_custom_call.1} parent=11 // pred_fallthru
          _
        // Predicated region
        $region33: #{tpu_custom_call.1} parent=11 // pred_check
          %p227 = pneg %p171
        $region34: #{tpu_custom_call.1} parent=11 // pred_check_branch
          %229 = sbr.rel (%p227) target = $region36
        $region35: #{tpu_custom_call.1} parent=11 // pred_region
          _
        $region36: #{tpu_custom_call.1} parent=11 // pred_fallthru
          _
      $region12: #{tpu_custom_call.1} parent=5 // pred_fallthru
        _
      %p230 = scmp.lt.s32.totalorder %s19, 2
      // Predicated region
      $region37: #{tpu_custom_call.1} parent=5 // pred_check
        %p231 = pneg %p230
      $region38: #{tpu_custom_call.1} parent=5 // pred_check_branch
        %233 = sbr.rel (%p231) target = $region40
      $region39: #{tpu_custom_call.1} parent=5 // pred_region
        // Predicated region
        $region41: #{tpu_custom_call.1} parent=39 // pred_check
          %p234 = pneg %p39
        $region42: #{tpu_custom_call.1} parent=39 // pred_check_branch
          %236 = sbr.rel (%p234) target = $region44
        $region43: #{tpu_custom_call.1} parent=39 // pred_region
          %s237 = sand.u32 %s29, 1
          %s238 = scalar_lea.sflag [#allocation3], %s237
          %s239 = sand.u32 %s29, 1
          %s240 = smul.addr %s239, 256
          %s241 = scalar_lea.vmem [#allocation2], %s240
          %s242 = smul.u32 8, %s19
          %s244 = ssub.s32 4096, 4096
          %245 = vsyncadd %s238, %s244
          %s246 = smul.addr %s242, 4
          %s247 = smul.addr %s246, 128
          %s248 = scalar_lea.hbm %s0, %s247
          %s249 = sshll.u32 %s241, 4
          %s250 = int_to_ptr.vmem [resolvable:$true] %s249
          %255 = dma.hbm_to_vmem [thread:$0]  %s248, 4096, %s250, %s238, 128, 128, 8
        $region44: #{tpu_custom_call.1} parent=39 // pred_fallthru
          _
      $region40: #{tpu_custom_call.1} parent=5 // pred_fallthru
        _
      %p256 = scmp.le.s32.totalorder 1, %s19
      %p257 = scmp.lt.s32.totalorder %s19, 3
      %p258 = pnand %p256, %p257
      %p259 = pneg %p258
      // Predicated region
      $region45: #{tpu_custom_call.1} parent=5 // pred_check
        _
      $region46: #{tpu_custom_call.1} parent=5 // pred_check_branch
        %261 = sbr.rel (%p258) target = $region48
      $region47: #{tpu_custom_call.1} parent=5 // pred_region
        %s262 = ssub.s32 %s19, 1
        %s263 = sand.u32 %s32, 1
        %s264 = scalar_lea.sflag [#allocation3], %s263
        %s265 = sand.u32 %s32, 1
        %s266 = smul.addr %s265, 256
        %s267 = scalar_lea.vmem [#allocation2], %s266
        // Predicated region
        $region49: #{tpu_custom_call.1} parent=47 // pred_check
          %p268 = pneg %p45
        $region50: #{tpu_custom_call.1} parent=47 // pred_check_branch
          %270 = sbr.rel (%p268) target = $region52
        $region51: #{tpu_custom_call.1} parent=47 // pred_region
          %271 = dma.done %s264, 4096
        $region52: #{tpu_custom_call.1} parent=47 // pred_fallthru
          _
        %s272 = sand.u32 %s32, 1
        %s273 = scalar_lea.sflag [#allocation3], %s272
        %s274 = sand.u32 %s32, 1
        %s275 = smul.addr %s274, 256
        %s276 = scalar_lea.vmem [#allocation2], %s275
        %p277 = pneg %p45
        %p278 = pneg %p42
        %p279 = pneg %p66
        %p280 = pneg %p63
        %p281 = pneg %p87
        %p282 = pneg %p84
        %p283 = pneg %p108
        %p284 = pneg %p105
        %p285 = pneg %p129
        %p286 = pneg %p126
        %p287 = pneg %p150
        %p288 = pneg %p147
        %p289 = pneg %p171
        %p290 = pneg %p168
        %p291 = pneg %p197
        %p292 = pneg %p194
        %s293 = sand.u32 %s184, 1
        %s294 = scalar_lea.sflag [#allocation4], %s293
        %s295 = sand.u32 %s184, 1
        %s296 = smul.addr %s295, 8
        %s297 = scalar_lea.vmem [#allocation5], %s296
        %s298 = smul.u32 8, %s24
        %s299 = smul.u32 8, %s24
        %v301 = vld [vmem:[%s267] sm:$0xff]
        %v302 = vld [vmem:[%s267 + $0x8] sm:$0xff]
        %v303 = vld [vmem:[%s267 + $0x10] sm:$0xff]
        %v304 = vld [vmem:[%s267 + $0x18] sm:$0xff]
        %v305 = vld [vmem:[%s267 + $0x20] sm:$0xff]
        %v306 = vld [vmem:[%s267 + $0x28] sm:$0xff]
        %v307 = vld [vmem:[%s267 + $0x30] sm:$0xff]
        %v308 = vld [vmem:[%s267 + $0x38] sm:$0xff]
        %v309 = vld [vmem:[%s267 + $0x40] sm:$0xff]
        %v310 = vld [vmem:[%s267 + $0x48] sm:$0xff]
        %v311 = vld [vmem:[%s267 + $0x50] sm:$0xff]
        %v312 = vld [vmem:[%s267 + $0x58] sm:$0xff]
        %v313 = vld [vmem:[%s267 + $0x60] sm:$0xff]
        %v314 = vld [vmem:[%s267 + $0x68] sm:$0xff]
        %v315 = vld [vmem:[%s267 + $0x70] sm:$0xff]
        %v316 = vld [vmem:[%s267 + $0x78] sm:$0xff]
        %v317 = vld [vmem:[%s267 + $0x80] sm:$0xff]
        %v318 = vld [vmem:[%s267 + $0x88] sm:$0xff]
        %v319 = vld [vmem:[%s267 + $0x90] sm:$0xff]
        %v320 = vld [vmem:[%s267 + $0x98] sm:$0xff]
        %v321 = vld [vmem:[%s267 + $0xa0] sm:$0xff]
        %v322 = vld [vmem:[%s267 + $0xa8] sm:$0xff]
        %v323 = vld [vmem:[%s267 + $0xb0] sm:$0xff]
        %v324 = vld [vmem:[%s267 + $0xb8] sm:$0xff]
        %v325 = vld [vmem:[%s267 + $0xc0] sm:$0xff]
        %v326 = vld [vmem:[%s267 + $0xc8] sm:$0xff]
        %v327 = vld [vmem:[%s267 + $0xd0] sm:$0xff]
        %v328 = vld [vmem:[%s267 + $0xd8] sm:$0xff]
        %v329 = vld [vmem:[%s267 + $0xe0] sm:$0xff]
        %v330 = vld [vmem:[%s267 + $0xe8] sm:$0xff]
        %v331 = vld [vmem:[%s267 + $0xf0] sm:$0xff]
        %v332 = vld [vmem:[%s267 + $0xf8] sm:$0xff]
        %v333 = vpack.c.bf16 %v302, %v301
        %v334 = vpack.c.bf16 %v304, %v303
        %v335 = vpack.c.bf16 %v306, %v305
        %v336 = vpack.c.bf16 %v308, %v307
        %v337 = vpack.c.bf16 %v310, %v309
        %v338 = vpack.c.bf16 %v312, %v311
        %v339 = vpack.c.bf16 %v314, %v313
        %v340 = vpack.c.bf16 %v316, %v315
        %v341 = vpack.c.bf16 %v318, %v317
        %v342 = vpack.c.bf16 %v320, %v319
        %v343 = vpack.c.bf16 %v322, %v321
        %v344 = vpack.c.bf16 %v324, %v323
        %v345 = vpack.c.bf16 %v326, %v325
        %v346 = vpack.c.bf16 %v328, %v327
        %v347 = vpack.c.bf16 %v330, %v329
        %v348 = vpack.c.bf16 %v332, %v331
        %v349 = vld [vmem:[%s1] sm:$0xf]
        %v350 = vld [vmem:[%s1 + $0x4] sm:$0xf]
        %v351 = vld [vmem:[%s1 + $0x8] sm:$0xf]
        %v352 = vld [vmem:[%s1 + $0xc] sm:$0xf]
        %v353 = vld [vmem:[%s1 + $0x10] sm:$0xf]
        %v354 = vld [vmem:[%s1 + $0x14] sm:$0xf]
        %v355 = vld [vmem:[%s1 + $0x18] sm:$0xf]
        %v356 = vld [vmem:[%s1 + $0x1c] sm:$0xf]
        %v365 = vunpack.c.l.b16 %v349
        %v366 = vunpack.c.l.b16 %v350
        %v367 = vunpack.c.l.b16 %v351
        %v368 = vunpack.c.l.b16 %v352
        %v369 = vunpack.c.l.b16 %v353
        %v370 = vunpack.c.l.b16 %v354
        %v371 = vunpack.c.l.b16 %v355
        %v372 = vunpack.c.l.b16 %v356
        %v373 = vpack.c.b16 %v366, %v365
        %v374 = vpack.c.b16 %v368, %v367
        %v375 = vpack.c.b16 %v370, %v369
        %v376 = vpack.c.b16 %v372, %v371
        %vm381 = vcmask 523264
        %v383 = vsel %vm381, %v333, 0
        %v386 = vsel %vm381, %v334, 0
        %v389 = vsel %vm381, %v335, 0
        %v392 = vsel %vm381, %v336, 0
        %v395 = vsel %vm381, %v337, 0
        %v398 = vsel %vm381, %v338, 0
        %v401 = vsel %vm381, %v339, 0
        %v404 = vsel %vm381, %v340, 0
        %v407 = vsel %vm381, %v341, 0
        %v410 = vsel %vm381, %v342, 0
        %v413 = vsel %vm381, %v343, 0
        %v416 = vsel %vm381, %v344, 0
        %v419 = vsel %vm381, %v345, 0
        %v422 = vsel %vm381, %v346, 0
        %v425 = vsel %vm381, %v347, 0
        %v428 = vsel %vm381, %v348, 0
        %430 = vmatprep.subr.bf16.mxu0 0
        %431 = vmatpush1.bf16.msra.mxu0 %v373
        %432 = vmatprep.subr.bf16.mxu0 0
        %433 = vmatpush1.bf16.msra.mxu0 %v374
        %434 = vmatprep.subr.bf16.mxu0 0
        %435 = vmatpush1.bf16.msra.mxu0 %v375
        %436 = vmatprep.subr.bf16.mxu0 0
        %437 = vmatpush1.bf16.msra.mxu0 %v376
        %438 = vmatprep.subr.bf16.mxu0 0
        %439 = vmatpush1.bf16.msra.mxu0 0
        %440 = vmatprep.subr.bf16.mxu0 0
        %441 = vmatpush1.bf16.msra.mxu0 0
        %442 = vmatprep.subr.bf16.mxu0 0
        %443 = vmatpush1.bf16.msra.mxu0 0
        %444 = vmatprep.subr.bf16.mxu0 0
        %445 = vmatpush1.bf16.msra.mxu0 0
        %446 = vmatprep.subr.bf16.mxu0 0
        %447 = vmatpush1.bf16.msra.mxu0 0
        %448 = vmatprep.subr.bf16.mxu0 0
        %449 = vmatpush1.bf16.msra.mxu0 0
        %450 = vmatprep.subr.bf16.mxu0 0
        %451 = vmatpush1.bf16.msra.mxu0 0
        %452 = vmatprep.subr.bf16.mxu0 0
        %453 = vmatpush1.bf16.msra.mxu0 0
        %454 = vmatprep.subr.bf16.mxu0 0
        %455 = vmatpush1.bf16.msra.mxu0 0
        %456 = vmatprep.subr.bf16.mxu0 0
        %457 = vmatpush1.bf16.msra.mxu0 0
        %458 = vmatprep.subr.bf16.mxu0 0
        %459 = vmatpush1.bf16.msra.mxu0 0
        %460 = vmatprep.subr.bf16.mxu0 0
        %461 = vmatpush1.bf16.msra.mxu0 0
        %462 = vmatprep.mubr.bf16.mxu0 0
        %463 = vmatmul.mubr.bf16.gmra.mrb[0].mxu0 %v383
        %v464 = vpop.f32.mrb[0].mxu0
        %v465 = vadd.f32 0.0, %v464
        %v466 = vpop.f32.mrb[0].mxu0
        %v467 = vpop.f32.mrb[0].mxu0
        %v468 = vadd.f32 0.0, %v467
        %v469 = vpop.f32.mrb[0].mxu0
        %470 = vmatprep.mubr.bf16.mxu0 0
        %471 = vmatmul.mubr.bf16.gmra.mrb[0].mxu0 %v386
        %v472 = vpop.f32.mrb[0].mxu0
        %v473 = vadd.f32 0.0, %v472
        %v474 = vpop.f32.mrb[0].mxu0
        %v475 = vpop.f32.mrb[0].mxu0
        %v476 = vadd.f32 0.0, %v475
        %v477 = vpop.f32.mrb[0].mxu0
        %478 = vmatprep.mubr.bf16.mxu0 0
        %479 = vmatmul.mubr.bf16.gmra.mrb[0].mxu0 %v389
        %v480 = vpop.f32.mrb[0].mxu0
        %v481 = vadd.f32 0.0, %v480
        %v482 = vpop.f32.mrb[0].mxu0
        %v483 = vpop.f32.mrb[0].mxu0
        %v484 = vadd.f32 0.0, %v483
        %v485 = vpop.f32.mrb[0].mxu0
        %486 = vmatprep.mubr.bf16.mxu0 0
        %487 = vmatmul.mubr.bf16.gmra.mrb[0].mxu0 %v392
        %v488 = vpop.f32.mrb[0].mxu0
        %v489 = vadd.f32 0.0, %v488
        %v490 = vpop.f32.mrb[0].mxu0
        %v491 = vpop.f32.mrb[0].mxu0
        %v492 = vadd.f32 0.0, %v491
        %v493 = vpop.f32.mrb[0].mxu0
        %494 = vmatprep.mubr.bf16.mxu0 0
        %495 = vmatmul.mubr.bf16.gmra.mrb[0].mxu0 %v395
        %v496 = vpop.f32.mrb[0].mxu0
        %v497 = vadd.f32 0.0, %v496
        %v498 = vpop.f32.mrb[0].mxu0
        %v499 = vpop.f32.mrb[0].mxu0
        %v500 = vadd.f32 0.0, %v499
        %v501 = vpop.f32.mrb[0].mxu0
        %502 = vmatprep.mubr.bf16.mxu0 0
        %503 = vmatmul.mubr.bf16.gmra.mrb[0].mxu0 %v398
        %v504 = vpop.f32.mrb[0].mxu0
        %v505 = vadd.f32 0.0, %v504
        %v506 = vpop.f32.mrb[0].mxu0
        %v507 = vpop.f32.mrb[0].mxu0
        %v508 = vadd.f32 0.0, %v507
        %v509 = vpop.f32.mrb[0].mxu0
        %510 = vmatprep.mubr.bf16.mxu0 0
        %511 = vmatmul.mubr.bf16.gmra.mrb[0].mxu0 %v401
        %v512 = vpop.f32.mrb[0].mxu0
        %v513 = vadd.f32 0.0, %v512
        %v514 = vpop.f32.mrb[0].mxu0
        %v515 = vpop.f32.mrb[0].mxu0
        %v516 = vadd.f32 0.0, %v515
        %v517 = vpop.f32.mrb[0].mxu0
        %518 = vmatprep.mubr.bf16.mxu0 0
        %519 = vmatmul.mubr.bf16.gmra.mrb[0].mxu0 %v404
        %v520 = vpop.f32.mrb[0].mxu0
        %v521 = vadd.f32 0.0, %v520
        %v522 = vpop.f32.mrb[0].mxu0
        %v523 = vpop.f32.mrb[0].mxu0
        %v524 = vadd.f32 0.0, %v523
        %v525 = vpop.f32.mrb[0].mxu0
        %526 = vmatprep.mubr.bf16.mxu0 0
        %527 = vmatmul.mubr.bf16.gmra.mrb[0].mxu0 %v407
        %v528 = vpop.f32.mrb[0].mxu0
        %v529 = vadd.f32 0.0, %v528
        %v530 = vpop.f32.mrb[0].mxu0
        %v531 = vpop.f32.mrb[0].mxu0
        %v532 = vadd.f32 0.0, %v531
        %v533 = vpop.f32.mrb[0].mxu0
        %534 = vmatprep.mubr.bf16.mxu0 0
        %535 = vmatmul.mubr.bf16.gmra.mrb[0].mxu0 %v410
        %v536 = vpop.f32.mrb[0].mxu0
        %v537 = vadd.f32 0.0, %v536
        %v538 = vpop.f32.mrb[0].mxu0
        %v539 = vpop.f32.mrb[0].mxu0
        %v540 = vadd.f32 0.0, %v539
        %v541 = vpop.f32.mrb[0].mxu0
        %542 = vmatprep.mubr.bf16.mxu0 0
        %543 = vmatmul.mubr.bf16.gmra.mrb[0].mxu0 %v413
        %v544 = vpop.f32.mrb[0].mxu0
        %v545 = vadd.f32 0.0, %v544
        %v546 = vpop.f32.mrb[0].mxu0
        %v547 = vpop.f32.mrb[0].mxu0
        %v548 = vadd.f32 0.0, %v547
        %v549 = vpop.f32.mrb[0].mxu0
        %550 = vmatprep.mubr.bf16.mxu0 0
        %551 = vmatmul.mubr.bf16.gmra.mrb[0].mxu0 %v416
        %v552 = vpop.f32.mrb[0].mxu0
        %v553 = vadd.f32 0.0, %v552
        %v554 = vpop.f32.mrb[0].mxu0
        %v555 = vpop.f32.mrb[0].mxu0
        %v556 = vadd.f32 0.0, %v555
        %v557 = vpop.f32.mrb[0].mxu0
        %558 = vmatprep.mubr.bf16.mxu0 0
        %559 = vmatmul.mubr.bf16.gmra.mrb[0].mxu0 %v419
        %v560 = vpop.f32.mrb[0].mxu0
        %v561 = vadd.f32 0.0, %v560
        %v562 = vpop.f32.mrb[0].mxu0
        %v563 = vpop.f32.mrb[0].mxu0
        %v564 = vadd.f32 0.0, %v563
        %v565 = vpop.f32.mrb[0].mxu0
        %566 = vmatprep.mubr.bf16.mxu0 0
        %567 = vmatmul.mubr.bf16.gmra.mrb[0].mxu0 %v422
        %v568 = vpop.f32.mrb[0].mxu0
        %v569 = vadd.f32 0.0, %v568
        %v570 = vpop.f32.mrb[0].mxu0
        %v571 = vpop.f32.mrb[0].mxu0
        %v572 = vadd.f32 0.0, %v571
        %v573 = vpop.f32.mrb[0].mxu0
        %574 = vmatprep.mubr.bf16.mxu0 0
        %575 = vmatmul.mubr.bf16.gmra.mrb[0].mxu0 %v425
        %v576 = vpop.f32.mrb[0].mxu0
        %v577 = vadd.f32 0.0, %v576
        %v578 = vpop.f32.mrb[0].mxu0
        %v579 = vpop.f32.mrb[0].mxu0
        %v580 = vadd.f32 0.0, %v579
        %v581 = vpop.f32.mrb[0].mxu0
        %582 = vmatprep.mubr.bf16.mxu0 0
        %583 = vmatmul.mubr.bf16.gmra.mrb[0].mxu0 %v428
        %v584 = vpop.f32.mrb[0].mxu0
        %v585 = vadd.f32 0.0, %v584
        %v586 = vpop.f32.mrb[0].mxu0
        %v587 = vpop.f32.mrb[0].mxu0
        %v588 = vadd.f32 0.0, %v587
        %v589 = vpop.f32.mrb[0].mxu0
        %590 = vdwg.mxu0
        %v591 = vmul.f32 %v465, %v465
        %v592 = vmul.f32 %v468, %v468
        %v593 = vmul.f32 %v473, %v473
        %v594 = vmul.f32 %v476, %v476
        %v595 = vmul.f32 %v481, %v481
        %v596 = vmul.f32 %v484, %v484
        %v597 = vmul.f32 %v489, %v489
        %v598 = vmul.f32 %v492, %v492
        %v599 = vmul.f32 %v497, %v497
        %v600 = vmul.f32 %v500, %v500
        %v601 = vmul.f32 %v505, %v505
        %v602 = vmul.f32 %v508, %v508
        %v603 = vmul.f32 %v513, %v513
        %v604 = vmul.f32 %v516, %v516
        %v605 = vmul.f32 %v521, %v521
        %v606 = vmul.f32 %v524, %v524
        %v607 = vmul.f32 %v529, %v529
        %v608 = vmul.f32 %v532, %v532
        %v609 = vmul.f32 %v537, %v537
        %v610 = vmul.f32 %v540, %v540
        %v611 = vmul.f32 %v545, %v545
        %v612 = vmul.f32 %v548, %v548
        %v613 = vmul.f32 %v553, %v553
        %v614 = vmul.f32 %v556, %v556
        %v615 = vmul.f32 %v561, %v561
        %v616 = vmul.f32 %v564, %v564
        %v617 = vmul.f32 %v569, %v569
        %v618 = vmul.f32 %v572, %v572
        %v619 = vmul.f32 %v577, %v577
        %v620 = vmul.f32 %v580, %v580
        %v621 = vmul.f32 %v585, %v585
        %v622 = vmul.f32 %v588, %v588
        %v623 = vadd.f32 %v591, 1e-06
        %v624 = vadd.f32 %v592, 1e-06
        %v625 = vadd.f32 %v593, 1e-06
        %v626 = vadd.f32 %v594, 1e-06
        %v627 = vadd.f32 %v595, 1e-06
        %v628 = vadd.f32 %v596, 1e-06
        %v629 = vadd.f32 %v597, 1e-06
        %v630 = vadd.f32 %v598, 1e-06
        %v631 = vadd.f32 %v599, 1e-06
        %v632 = vadd.f32 %v600, 1e-06
        %v633 = vadd.f32 %v601, 1e-06
        %v634 = vadd.f32 %v602, 1e-06
        %v635 = vadd.f32 %v603, 1e-06
        %v636 = vadd.f32 %v604, 1e-06
        %v637 = vadd.f32 %v605, 1e-06
        %v638 = vadd.f32 %v606, 1e-06
        %v639 = vadd.f32 %v607, 1e-06
        %v640 = vadd.f32 %v608, 1e-06
        %v641 = vadd.f32 %v609, 1e-06
        %v642 = vadd.f32 %v610, 1e-06
        %v643 = vadd.f32 %v611, 1e-06
        %v644 = vadd.f32 %v612, 1e-06
        %v645 = vadd.f32 %v613, 1e-06
        %v646 = vadd.f32 %v614, 1e-06
        %v647 = vadd.f32 %v615, 1e-06
        %v648 = vadd.f32 %v616, 1e-06
        %v649 = vadd.f32 %v617, 1e-06
        %v650 = vadd.f32 %v618, 1e-06
        %v651 = vadd.f32 %v619, 1e-06
        %v652 = vadd.f32 %v620, 1e-06
        %v653 = vadd.f32 %v621, 1e-06
        %v654 = vadd.f32 %v622, 1e-06
        %v655 = vlog2.pop %v623
        %v656 = vmul.f32 %v655, 0.6931472
        %v657 = vlog2.pop %v624
        %v658 = vmul.f32 %v657, 0.6931472
        %v659 = vlog2.pop %v625
        %v660 = vmul.f32 %v659, 0.6931472
        %v661 = vlog2.pop %v626
        %v662 = vmul.f32 %v661, 0.6931472
        %v663 = vlog2.pop %v627
        %v664 = vmul.f32 %v663, 0.6931472
        %v665 = vlog2.pop %v628
        %v666 = vmul.f32 %v665, 0.6931472
        %v667 = vlog2.pop %v629
        %v668 = vmul.f32 %v667, 0.6931472
        %v669 = vlog2.pop %v630
        %v670 = vmul.f32 %v669, 0.6931472
        %v671 = vlog2.pop %v631
        %v672 = vmul.f32 %v671, 0.6931472
        %v673 = vlog2.pop %v632
        %v674 = vmul.f32 %v673, 0.6931472
        %v675 = vlog2.pop %v633
        %v676 = vmul.f32 %v675, 0.6931472
        %v677 = vlog2.pop %v634
        %v678 = vmul.f32 %v677, 0.6931472
        %v679 = vlog2.pop %v635
        %v680 = vmul.f32 %v679, 0.6931472
        %v681 = vlog2.pop %v636
        %v682 = vmul.f32 %v681, 0.6931472
        %v683 = vlog2.pop %v637
        %v684 = vmul.f32 %v683, 0.6931472
        %v685 = vlog2.pop %v638
        %v686 = vmul.f32 %v685, 0.6931472
        %v687 = vlog2.pop %v639
        %v688 = vmul.f32 %v687, 0.6931472
        %v689 = vlog2.pop %v640
        %v690 = vmul.f32 %v689, 0.6931472
        %v691 = vlog2.pop %v641
        %v692 = vmul.f32 %v691, 0.6931472
        %v693 = vlog2.pop %v642
        %v694 = vmul.f32 %v693, 0.6931472
        %v695 = vlog2.pop %v643
        %v696 = vmul.f32 %v695, 0.6931472
        %v697 = vlog2.pop %v644
        %v698 = vmul.f32 %v697, 0.6931472
        %v699 = vlog2.pop %v645
        %v700 = vmul.f32 %v699, 0.6931472
        %v701 = vlog2.pop %v646
        %v702 = vmul.f32 %v701, 0.6931472
        %v703 = vlog2.pop %v647
        %v704 = vmul.f32 %v703, 0.6931472
        %v705 = vlog2.pop %v648
        %v706 = vmul.f32 %v705, 0.6931472
        %v707 = vlog2.pop %v649
        %v708 = vmul.f32 %v707, 0.6931472
        %v709 = vlog2.pop %v650
        %v710 = vmul.f32 %v709, 0.6931472
        %v711 = vlog2.pop %v651
        %v712 = vmul.f32 %v711, 0.6931472
        %v713 = vlog2.pop %v652
        %v714 = vmul.f32 %v713, 0.6931472
        %v715 = vlog2.pop %v653
        %v716 = vmul.f32 %v715, 0.6931472
        %v717 = vlog2.pop %v654
        %v718 = vmul.f32 %v717, 0.6931472
        %vm719 = vcmask 261120
        %v720 = vsel %vm719, %v656, 0.0
        %v721 = vsel %vm719, %v658, 0.0
        %v722 = vadd.f32 %v720, %v721
        %v723 = vsel %vm719, %v660, 0.0
        %v724 = vadd.f32 %v722, %v723
        %v725 = vsel %vm719, %v662, 0.0
        %v726 = vadd.f32 %v724, %v725
        %v727 = vrot.slane %v726, 4
        %v728 = vadd.f32 %v726, %v727
        %v729 = vrot.slane %v728, 2
        %v730 = vadd.f32 %v728, %v729
        %v731 = vrot.slane %v730, 1
        %v732 = vadd.f32 %v730, %v731
        %v733 = vsel %vm719, %v664, 0.0
        %v734 = vsel %vm719, %v666, 0.0
        %v735 = vadd.f32 %v733, %v734
        %v736 = vsel %vm719, %v668, 0.0
        %v737 = vadd.f32 %v735, %v736
        %v738 = vsel %vm719, %v670, 0.0
        %v739 = vadd.f32 %v737, %v738
        %v740 = vrot.slane %v739, 4
        %v741 = vadd.f32 %v739, %v740
        %v742 = vrot.slane %v741, 2
        %v743 = vadd.f32 %v741, %v742
        %v744 = vrot.slane %v743, 1
        %v745 = vadd.f32 %v743, %v744
        %v746 = vsel %vm719, %v672, 0.0
        %v747 = vsel %vm719, %v674, 0.0
        %v748 = vadd.f32 %v746, %v747
        %v749 = vsel %vm719, %v676, 0.0
        %v750 = vadd.f32 %v748, %v749
        %v751 = vsel %vm719, %v678, 0.0
        %v752 = vadd.f32 %v750, %v751
        %v753 = vrot.slane %v752, 4
        %v754 = vadd.f32 %v752, %v753
        %v755 = vrot.slane %v754, 2
        %v756 = vadd.f32 %v754, %v755
        %v757 = vrot.slane %v756, 1
        %v758 = vadd.f32 %v756, %v757
        %v759 = vsel %vm719, %v680, 0.0
        %v760 = vsel %vm719, %v682, 0.0
        %v761 = vadd.f32 %v759, %v760
        %v762 = vsel %vm719, %v684, 0.0
        %v763 = vadd.f32 %v761, %v762
        %v764 = vsel %vm719, %v686, 0.0
        %v765 = vadd.f32 %v763, %v764
        %v766 = vrot.slane %v765, 4
        %v767 = vadd.f32 %v765, %v766
        %v768 = vrot.slane %v767, 2
        %v769 = vadd.f32 %v767, %v768
        %v770 = vrot.slane %v769, 1
        %v771 = vadd.f32 %v769, %v770
        %v772 = vsel %vm719, %v688, 0.0
        %v773 = vsel %vm719, %v690, 0.0
        %v774 = vadd.f32 %v772, %v773
        %v775 = vsel %vm719, %v692, 0.0
        %v776 = vadd.f32 %v774, %v775
        %v777 = vsel %vm719, %v694, 0.0
        %v778 = vadd.f32 %v776, %v777
        %v779 = vrot.slane %v778, 4
        %v780 = vadd.f32 %v778, %v779
        %v781 = vrot.slane %v780, 2
        %v782 = vadd.f32 %v780, %v781
        %v783 = vrot.slane %v782, 1
        %v784 = vadd.f32 %v782, %v783
        %v785 = vsel %vm719, %v696, 0.0
        %v786 = vsel %vm719, %v698, 0.0
        %v787 = vadd.f32 %v785, %v786
        %v788 = vsel %vm719, %v700, 0.0
        %v789 = vadd.f32 %v787, %v788
        %v790 = vsel %vm719, %v702, 0.0
        %v791 = vadd.f32 %v789, %v790
        %v792 = vrot.slane %v791, 4
        %v793 = vadd.f32 %v791, %v792
        %v794 = vrot.slane %v793, 2
        %v795 = vadd.f32 %v793, %v794
        %v796 = vrot.slane %v795, 1
        %v797 = vadd.f32 %v795, %v796
        %v798 = vsel %vm719, %v704, 0.0
        %v799 = vsel %vm719, %v706, 0.0
        %v800 = vadd.f32 %v798, %v799
        %v801 = vsel %vm719, %v708, 0.0
        %v802 = vadd.f32 %v800, %v801
        %v803 = vsel %vm719, %v710, 0.0
        %v804 = vadd.f32 %v802, %v803
        %v805 = vrot.slane %v804, 4
        %v806 = vadd.f32 %v804, %v805
        %v807 = vrot.slane %v806, 2
        %v808 = vadd.f32 %v806, %v807
        %v809 = vrot.slane %v808, 1
        %v810 = vadd.f32 %v808, %v809
        %v811 = vsel %vm719, %v712, 0.0
        %v812 = vsel %vm719, %v714, 0.0
        %v813 = vadd.f32 %v811, %v812
        %v814 = vsel %vm719, %v716, 0.0
        %v815 = vadd.f32 %v813, %v814
        %v816 = vsel %vm719, %v718, 0.0
        %v817 = vadd.f32 %v815, %v816
        %v818 = vrot.slane %v817, 4
        %v819 = vadd.f32 %v817, %v818
        %v820 = vrot.slane %v819, 2
        %v821 = vadd.f32 %v819, %v820
        %v822 = vrot.slane %v821, 1
        %v823 = vadd.f32 %v821, %v822
        %v824 = vrcp.pop 32.0
        %v825 = vmul.f32 %v732, %v824
        %v826 = vmul.f32 %v745, %v824
        %v827 = vmul.f32 %v758, %v824
        %v828 = vmul.f32 %v771, %v824
        %v829 = vmul.f32 %v784, %v824
        %v830 = vmul.f32 %v797, %v824
        %v831 = vmul.f32 %v810, %v824
        %v832 = vmul.f32 %v823, %v824
        %v833 = vsub.f32 %v656, %v825
        %v834 = vsub.f32 %v658, %v825
        %v835 = vsub.f32 %v660, %v825
        %v836 = vsub.f32 %v662, %v825
        %v837 = vsub.f32 %v664, %v826
        %v838 = vsub.f32 %v666, %v826
        %v839 = vsub.f32 %v668, %v826
        %v840 = vsub.f32 %v670, %v826
        %v841 = vsub.f32 %v672, %v827
        %v842 = vsub.f32 %v674, %v827
        %v843 = vsub.f32 %v676, %v827
        %v844 = vsub.f32 %v678, %v827
        %v845 = vsub.f32 %v680, %v828
        %v846 = vsub.f32 %v682, %v828
        %v847 = vsub.f32 %v684, %v828
        %v848 = vsub.f32 %v686, %v828
        %v849 = vsub.f32 %v688, %v829
        %v850 = vsub.f32 %v690, %v829
        %v851 = vsub.f32 %v692, %v829
        %v852 = vsub.f32 %v694, %v829
        %v853 = vsub.f32 %v696, %v830
        %v854 = vsub.f32 %v698, %v830
        %v855 = vsub.f32 %v700, %v830
        %v856 = vsub.f32 %v702, %v830
        %v857 = vsub.f32 %v704, %v831
        %v858 = vsub.f32 %v706, %v831
        %v859 = vsub.f32 %v708, %v831
        %v860 = vsub.f32 %v710, %v831
        %v861 = vsub.f32 %v712, %v832
        %v862 = vsub.f32 %v714, %v832
        %v863 = vsub.f32 %v716, %v832
        %v864 = vsub.f32 %v718, %v832
        %v865 = vmul.f32 %v833, %v833
        %v866 = vmul.f32 %v834, %v834
        %v867 = vmul.f32 %v835, %v835
        %v868 = vmul.f32 %v836, %v836
        %v869 = vmul.f32 %v837, %v837
        %v870 = vmul.f32 %v838, %v838
        %v871 = vmul.f32 %v839, %v839
        %v872 = vmul.f32 %v840, %v840
        %v873 = vmul.f32 %v841, %v841
        %v874 = vmul.f32 %v842, %v842
        %v875 = vmul.f32 %v843, %v843
        %v876 = vmul.f32 %v844, %v844
        %v877 = vmul.f32 %v845, %v845
        %v878 = vmul.f32 %v846, %v846
        %v879 = vmul.f32 %v847, %v847
        %v880 = vmul.f32 %v848, %v848
        %v881 = vmul.f32 %v849, %v849
        %v882 = vmul.f32 %v850, %v850
        %v883 = vmul.f32 %v851, %v851
        %v884 = vmul.f32 %v852, %v852
        %v885 = vmul.f32 %v853, %v853
        %v886 = vmul.f32 %v854, %v854
        %v887 = vmul.f32 %v855, %v855
        %v888 = vmul.f32 %v856, %v856
        %v889 = vmul.f32 %v857, %v857
        %v890 = vmul.f32 %v858, %v858
        %v891 = vmul.f32 %v859, %v859
        %v892 = vmul.f32 %v860, %v860
        %v893 = vmul.f32 %v861, %v861
        %v894 = vmul.f32 %v862, %v862
        %v895 = vmul.f32 %v863, %v863
        %v896 = vmul.f32 %v864, %v864
        %v897 = vsel %vm719, %v865, 0.0
        %v898 = vsel %vm719, %v866, 0.0
        %v899 = vadd.f32 %v897, %v898
        %v900 = vsel %vm719, %v867, 0.0
        %v901 = vadd.f32 %v899, %v900
        %v902 = vsel %vm719, %v868, 0.0
        %v903 = vadd.f32 %v901, %v902
        %v904 = vrot.slane %v903, 4
        %v905 = vadd.f32 %v903, %v904
        %v906 = vrot.slane %v905, 2
        %v907 = vadd.f32 %v905, %v906
        %v908 = vrot.slane %v907, 1
        %v909 = vadd.f32 %v907, %v908
        %v910 = vsel %vm719, %v869, 0.0
        %v911 = vsel %vm719, %v870, 0.0
        %v912 = vadd.f32 %v910, %v911
        %v913 = vsel %vm719, %v871, 0.0
        %v914 = vadd.f32 %v912, %v913
        %v915 = vsel %vm719, %v872, 0.0
        %v916 = vadd.f32 %v914, %v915
        %v917 = vrot.slane %v916, 4
        %v918 = vadd.f32 %v916, %v917
        %v919 = vrot.slane %v918, 2
        %v920 = vadd.f32 %v918, %v919
        %v921 = vrot.slane %v920, 1
        %v922 = vadd.f32 %v920, %v921
        %v923 = vsel %vm719, %v873, 0.0
        %v924 = vsel %vm719, %v874, 0.0
        %v925 = vadd.f32 %v923, %v924
        %v926 = vsel %vm719, %v875, 0.0
        %v927 = vadd.f32 %v925, %v926
        %v928 = vsel %vm719, %v876, 0.0
        %v929 = vadd.f32 %v927, %v928
        %v930 = vrot.slane %v929, 4
        %v931 = vadd.f32 %v929, %v930
        %v932 = vrot.slane %v931, 2
        %v933 = vadd.f32 %v931, %v932
        %v934 = vrot.slane %v933, 1
        %v935 = vadd.f32 %v933, %v934
        %v936 = vsel %vm719, %v877, 0.0
        %v937 = vsel %vm719, %v878, 0.0
        %v938 = vadd.f32 %v936, %v937
        %v939 = vsel %vm719, %v879, 0.0
        %v940 = vadd.f32 %v938, %v939
        %v941 = vsel %vm719, %v880, 0.0
        %v942 = vadd.f32 %v940, %v941
        %v943 = vrot.slane %v942, 4
        %v944 = vadd.f32 %v942, %v943
        %v945 = vrot.slane %v944, 2
        %v946 = vadd.f32 %v944, %v945
        %v947 = vrot.slane %v946, 1
        %v948 = vadd.f32 %v946, %v947
        %v949 = vsel %vm719, %v881, 0.0
        %v950 = vsel %vm719, %v882, 0.0
        %v951 = vadd.f32 %v949, %v950
        %v952 = vsel %vm719, %v883, 0.0
        %v953 = vadd.f32 %v951, %v952
        %v954 = vsel %vm719, %v884, 0.0
        %v955 = vadd.f32 %v953, %v954
        %v956 = vrot.slane %v955, 4
        %v957 = vadd.f32 %v955, %v956
        %v958 = vrot.slane %v957, 2
        %v959 = vadd.f32 %v957, %v958
        %v960 = vrot.slane %v959, 1
        %v961 = vadd.f32 %v959, %v960
        %v962 = vsel %vm719, %v885, 0.0
        %v963 = vsel %vm719, %v886, 0.0
        %v964 = vadd.f32 %v962, %v963
        %v965 = vsel %vm719, %v887, 0.0
        %v966 = vadd.f32 %v964, %v965
        %v967 = vsel %vm719, %v888, 0.0
        %v968 = vadd.f32 %v966, %v967
        %v969 = vrot.slane %v968, 4
        %v970 = vadd.f32 %v968, %v969
        %v971 = vrot.slane %v970, 2
        %v972 = vadd.f32 %v970, %v971
        %v973 = vrot.slane %v972, 1
        %v974 = vadd.f32 %v972, %v973
        %v975 = vsel %vm719, %v889, 0.0
        %v976 = vsel %vm719, %v890, 0.0
        %v977 = vadd.f32 %v975, %v976
        %v978 = vsel %vm719, %v891, 0.0
        %v979 = vadd.f32 %v977, %v978
        %v980 = vsel %vm719, %v892, 0.0
        %v981 = vadd.f32 %v979, %v980
        %v982 = vrot.slane %v981, 4
        %v983 = vadd.f32 %v981, %v982
        %v984 = vrot.slane %v983, 2
        %v985 = vadd.f32 %v983, %v984
        %v986 = vrot.slane %v985, 1
        %v987 = vadd.f32 %v985, %v986
        %v988 = vsel %vm719, %v893, 0.0
        %v989 = vsel %vm719, %v894, 0.0
        %v990 = vadd.f32 %v988, %v989
        %v991 = vsel %vm719, %v895, 0.0
        %v992 = vadd.f32 %v990, %v991
        %v993 = vsel %vm719, %v896, 0.0
        %v994 = vadd.f32 %v992, %v993
        %v995 = vrot.slane %v994, 4
        %v996 = vadd.f32 %v994, %v995
        %v997 = vrot.slane %v996, 2
        %v998 = vadd.f32 %v996, %v997
        %v999 = vrot.slane %v998, 1
        %v1000 = vadd.f32 %v998, %v999
        %v1001 = vmul.f32 %v909, %v824
        %v1002 = vmul.f32 %v922, %v824
        %v1003 = vmul.f32 %v935, %v824
        %v1004 = vmul.f32 %v948, %v824
        %v1005 = vmul.f32 %v961, %v824
        %v1006 = vmul.f32 %v974, %v824
        %v1007 = vmul.f32 %v987, %v824
        %v1008 = vmul.f32 %v1000, %v824
        %v1009 = vadd.f32 %v1001, 1e-06
        %v1010 = vadd.f32 %v1002, 1e-06
        %v1011 = vadd.f32 %v1003, 1e-06
        %v1012 = vadd.f32 %v1004, 1e-06
        %v1013 = vadd.f32 %v1005, 1e-06
        %v1014 = vadd.f32 %v1006, 1e-06
        %v1015 = vadd.f32 %v1007, 1e-06
        %v1016 = vadd.f32 %v1008, 1e-06
        %v1017 = vrsqrt.pop %v1009
        %v1018 = vrsqrt.pop %v1010
        %v1019 = vrsqrt.pop %v1011
        %v1020 = vrsqrt.pop %v1012
        %v1021 = vrsqrt.pop %v1013
        %v1022 = vrsqrt.pop %v1014
        %v1023 = vrsqrt.pop %v1015
        %v1024 = vrsqrt.pop %v1016
        %v1025 = vmul.f32 %v833, %v1017
        %v1026 = vmul.f32 %v834, %v1017
        %v1027 = vmul.f32 %v835, %v1017
        %v1028 = vmul.f32 %v836, %v1017
        %v1029 = vmul.f32 %v837, %v1018
        %v1030 = vmul.f32 %v838, %v1018
        %v1031 = vmul.f32 %v839, %v1018
        %v1032 = vmul.f32 %v840, %v1018
        %v1033 = vmul.f32 %v841, %v1019
        %v1034 = vmul.f32 %v842, %v1019
        %v1035 = vmul.f32 %v843, %v1019
        %v1036 = vmul.f32 %v844, %v1019
        %v1037 = vmul.f32 %v845, %v1020
        %v1038 = vmul.f32 %v846, %v1020
        %v1039 = vmul.f32 %v847, %v1020
        %v1040 = vmul.f32 %v848, %v1020
        %v1041 = vmul.f32 %v849, %v1021
        %v1042 = vmul.f32 %v850, %v1021
        %v1043 = vmul.f32 %v851, %v1021
        %v1044 = vmul.f32 %v852, %v1021
        %v1045 = vmul.f32 %v853, %v1022
        %v1046 = vmul.f32 %v854, %v1022
        %v1047 = vmul.f32 %v855, %v1022
        %v1048 = vmul.f32 %v856, %v1022
        %v1049 = vmul.f32 %v857, %v1023
        %v1050 = vmul.f32 %v858, %v1023
        %v1051 = vmul.f32 %v859, %v1023
        %v1052 = vmul.f32 %v860, %v1023
        %v1053 = vmul.f32 %v861, %v1024
        %v1054 = vmul.f32 %v862, %v1024
        %v1055 = vmul.f32 %v863, %v1024
        %v1056 = vmul.f32 %v864, %v1024
        %v1057 = vpack.c.bf16 %v1026, %v1025
        %v1058 = vpack.c.bf16 %v1028, %v1027
        %v1059 = vpack.c.bf16 %v1030, %v1029
        %v1060 = vpack.c.bf16 %v1032, %v1031
        %v1061 = vpack.c.bf16 %v1034, %v1033
        %v1062 = vpack.c.bf16 %v1036, %v1035
        %v1063 = vpack.c.bf16 %v1038, %v1037
        %v1064 = vpack.c.bf16 %v1040, %v1039
        %v1065 = vpack.c.bf16 %v1042, %v1041
        %v1066 = vpack.c.bf16 %v1044, %v1043
        %v1067 = vpack.c.bf16 %v1046, %v1045
        %v1068 = vpack.c.bf16 %v1048, %v1047
        %v1069 = vpack.c.bf16 %v1050, %v1049
        %v1070 = vpack.c.bf16 %v1052, %v1051
        %v1071 = vpack.c.bf16 %v1054, %v1053
        %v1072 = vpack.c.bf16 %v1056, %v1055
        %v1073 = vld [vmem:[%s2] sm:$0xf]
        %v1074 = vld [vmem:[%s2 + $0x4] sm:$0xf]
        %v1075 = vld [vmem:[%s2 + $0x8] sm:$0xf]
        %v1076 = vld [vmem:[%s2 + $0xc] sm:$0xf]
        %v1077 = vld [vmem:[%s3] sm:$0x1]
        %v1079 = vlaneseq
        %v1080 = vshrl.u32 %v1079, 7
        %v1081 = vsub.s32 0, %v1080
        %v1082 = vrot.slane %v1077, %v1081
        %v1088 = vunpack.c.l.b16 %v1073
        %v1089 = vunpack.c.l.b16 %v1074
        %v1090 = vunpack.c.l.b16 %v1075
        %v1091 = vunpack.c.l.b16 %v1076
        %v1092 = vpack.c.b16 %v1089, %v1088
        %v1093 = vpack.c.b16 %v1091, %v1090
        %v1097 = vsel %vm719, %v1057, 0
        %v1100 = vsel %vm719, %v1058, 0
        %v1103 = vsel %vm719, %v1059, 0
        %v1106 = vsel %vm719, %v1060, 0
        %v1109 = vsel %vm719, %v1061, 0
        %v1112 = vsel %vm719, %v1062, 0
        %v1115 = vsel %vm719, %v1063, 0
        %v1118 = vsel %vm719, %v1064, 0
        %v1121 = vsel %vm719, %v1065, 0
        %v1124 = vsel %vm719, %v1066, 0
        %v1127 = vsel %vm719, %v1067, 0
        %v1130 = vsel %vm719, %v1068, 0
        %v1133 = vsel %vm719, %v1069, 0
        %v1136 = vsel %vm719, %v1070, 0
        %v1139 = vsel %vm719, %v1071, 0
        %v1142 = vsel %vm719, %v1072, 0
        %1144 = vmatprep.subr.bf16.mxu0 0
        %1145 = vmatpush1.bf16.msra.mxu0 %v1092
        %1146 = vmatprep.subr.bf16.mxu0 0
        %1147 = vmatpush1.bf16.msra.mxu0 %v1093
        %1148 = vmatprep.subr.bf16.mxu0 0
        %1149 = vmatpush1.bf16.msra.mxu0 0
        %1150 = vmatprep.subr.bf16.mxu0 0
        %1151 = vmatpush1.bf16.msra.mxu0 0
        %1152 = vmatprep.subr.bf16.mxu0 0
        %1153 = vmatpush1.bf16.msra.mxu0 0
        %1154 = vmatprep.subr.bf16.mxu0 0
        %1155 = vmatpush1.bf16.msra.mxu0 0
        %1156 = vmatprep.subr.bf16.mxu0 0
        %1157 = vmatpush1.bf16.msra.mxu0 0
        %1158 = vmatprep.subr.bf16.mxu0 0
        %1159 = vmatpush1.bf16.msra.mxu0 0
        %1160 = vmatprep.subr.bf16.mxu0 0
        %1161 = vmatpush1.bf16.msra.mxu0 0
        %1162 = vmatprep.subr.bf16.mxu0 0
        %1163 = vmatpush1.bf16.msra.mxu0 0
        %1164 = vmatprep.subr.bf16.mxu0 0
        %1165 = vmatpush1.bf16.msra.mxu0 0
        %1166 = vmatprep.subr.bf16.mxu0 0
        %1167 = vmatpush1.bf16.msra.mxu0 0
        %1168 = vmatprep.subr.bf16.mxu0 0
        %1169 = vmatpush1.bf16.msra.mxu0 0
        %1170 = vmatprep.subr.bf16.mxu0 0
        %1171 = vmatpush1.bf16.msra.mxu0 0
        %1172 = vmatprep.subr.bf16.mxu0 0
        %1173 = vmatpush1.bf16.msra.mxu0 0
        %1174 = vmatprep.subr.bf16.mxu0 0
        %1175 = vmatpush1.bf16.msra.mxu0 0
        %1176 = vmatprep.mubr.bf16.mxu0 0
        %1177 = vmatmul.mubr.bf16.gmra.mrb[0].mxu0 %v1097
        %v1178 = vpop.f32.mrb[0].mxu0
        %v1179 = vadd.f32 %v1082, %v1178
        %v1180 = vpop.f32.mrb[0].mxu0
        %v1181 = vpop.f32.mrb[0].mxu0
        %v1182 = vadd.f32 %v1082, %v1181
        %v1183 = vpop.f32.mrb[0].mxu0
        %1184 = vmatprep.mubr.bf16.mxu0 0
        %1185 = vmatmul.mubr.bf16.gmra.mrb[0].mxu0 %v1100
        %v1186 = vpop.f32.mrb[0].mxu0
        %v1187 = vadd.f32 %v1082, %v1186
        %v1188 = vpop.f32.mrb[0].mxu0
        %v1189 = vpop.f32.mrb[0].mxu0
        %v1190 = vadd.f32 %v1082, %v1189
        %v1191 = vpop.f32.mrb[0].mxu0
        %1192 = vmatprep.mubr.bf16.mxu0 0
        %1193 = vmatmul.mubr.bf16.gmra.mrb[0].mxu0 %v1103
        %v1194 = vpop.f32.mrb[0].mxu0
        %v1195 = vadd.f32 %v1082, %v1194
        %v1196 = vpop.f32.mrb[0].mxu0
        %v1197 = vpop.f32.mrb[0].mxu0
        %v1198 = vadd.f32 %v1082, %v1197
        %v1199 = vpop.f32.mrb[0].mxu0
        %1200 = vmatprep.mubr.bf16.mxu0 0
        %1201 = vmatmul.mubr.bf16.gmra.mrb[0].mxu0 %v1106
        %v1202 = vpop.f32.mrb[0].mxu0
        %v1203 = vadd.f32 %v1082, %v1202
        %v1204 = vpop.f32.mrb[0].mxu0
        %v1205 = vpop.f32.mrb[0].mxu0
        %v1206 = vadd.f32 %v1082, %v1205
        %v1207 = vpop.f32.mrb[0].mxu0
        %1208 = vmatprep.mubr.bf16.mxu0 0
        %1209 = vmatmul.mubr.bf16.gmra.mrb[0].mxu0 %v1109
        %v1210 = vpop.f32.mrb[0].mxu0
        %v1211 = vadd.f32 %v1082, %v1210
        %v1212 = vpop.f32.mrb[0].mxu0
        %v1213 = vpop.f32.mrb[0].mxu0
        %v1214 = vadd.f32 %v1082, %v1213
        %v1215 = vpop.f32.mrb[0].mxu0
        %1216 = vmatprep.mubr.bf16.mxu0 0
        %1217 = vmatmul.mubr.bf16.gmra.mrb[0].mxu0 %v1112
        %v1218 = vpop.f32.mrb[0].mxu0
        %v1219 = vadd.f32 %v1082, %v1218
        %v1220 = vpop.f32.mrb[0].mxu0
        %v1221 = vpop.f32.mrb[0].mxu0
        %v1222 = vadd.f32 %v1082, %v1221
        %v1223 = vpop.f32.mrb[0].mxu0
        %1224 = vmatprep.mubr.bf16.mxu0 0
        %1225 = vmatmul.mubr.bf16.gmra.mrb[0].mxu0 %v1115
        %v1226 = vpop.f32.mrb[0].mxu0
        %v1227 = vadd.f32 %v1082, %v1226
        %v1228 = vpop.f32.mrb[0].mxu0
        %v1229 = vpop.f32.mrb[0].mxu0
        %v1230 = vadd.f32 %v1082, %v1229
        %v1231 = vpop.f32.mrb[0].mxu0
        %1232 = vmatprep.mubr.bf16.mxu0 0
        %1233 = vmatmul.mubr.bf16.gmra.mrb[0].mxu0 %v1118
        %v1234 = vpop.f32.mrb[0].mxu0
        %v1235 = vadd.f32 %v1082, %v1234
        %v1236 = vpop.f32.mrb[0].mxu0
        %v1237 = vpop.f32.mrb[0].mxu0
        %v1238 = vadd.f32 %v1082, %v1237
        %v1239 = vpop.f32.mrb[0].mxu0
        %1240 = vmatprep.mubr.bf16.mxu0 0
        %1241 = vmatmul.mubr.bf16.gmra.mrb[0].mxu0 %v1121
        %v1242 = vpop.f32.mrb[0].mxu0
        %v1243 = vadd.f32 %v1082, %v1242
        %v1244 = vpop.f32.mrb[0].mxu0
        %v1245 = vpop.f32.mrb[0].mxu0
        %v1246 = vadd.f32 %v1082, %v1245
        %v1247 = vpop.f32.mrb[0].mxu0
        %1248 = vmatprep.mubr.bf16.mxu0 0
        %1249 = vmatmul.mubr.bf16.gmra.mrb[0].mxu0 %v1124
        %v1250 = vpop.f32.mrb[0].mxu0
        %v1251 = vadd.f32 %v1082, %v1250
        %v1252 = vpop.f32.mrb[0].mxu0
        %v1253 = vpop.f32.mrb[0].mxu0
        %v1254 = vadd.f32 %v1082, %v1253
        %v1255 = vpop.f32.mrb[0].mxu0
        %1256 = vmatprep.mubr.bf16.mxu0 0
        %1257 = vmatmul.mubr.bf16.gmra.mrb[0].mxu0 %v1127
        %v1258 = vpop.f32.mrb[0].mxu0
        %v1259 = vadd.f32 %v1082, %v1258
        %v1260 = vpop.f32.mrb[0].mxu0
        %v1261 = vpop.f32.mrb[0].mxu0
        %v1262 = vadd.f32 %v1082, %v1261
        %v1263 = vpop.f32.mrb[0].mxu0
        %1264 = vmatprep.mubr.bf16.mxu0 0
        %1265 = vmatmul.mubr.bf16.gmra.mrb[0].mxu0 %v1130
        %v1266 = vpop.f32.mrb[0].mxu0
        %v1267 = vadd.f32 %v1082, %v1266
        %v1268 = vpop.f32.mrb[0].mxu0
        %v1269 = vpop.f32.mrb[0].mxu0
        %v1270 = vadd.f32 %v1082, %v1269
        %v1271 = vpop.f32.mrb[0].mxu0
        %1272 = vmatprep.mubr.bf16.mxu0 0
        %1273 = vmatmul.mubr.bf16.gmra.mrb[0].mxu0 %v1133
        %v1274 = vpop.f32.mrb[0].mxu0
        %v1275 = vadd.f32 %v1082, %v1274
        %v1276 = vpop.f32.mrb[0].mxu0
        %v1277 = vpop.f32.mrb[0].mxu0
        %v1278 = vadd.f32 %v1082, %v1277
        %v1279 = vpop.f32.mrb[0].mxu0
        %1280 = vmatprep.mubr.bf16.mxu0 0
        %1281 = vmatmul.mubr.bf16.gmra.mrb[0].mxu0 %v1136
        %v1282 = vpop.f32.mrb[0].mxu0
        %v1283 = vadd.f32 %v1082, %v1282
        %v1284 = vpop.f32.mrb[0].mxu0
        %v1285 = vpop.f32.mrb[0].mxu0
        %v1286 = vadd.f32 %v1082, %v1285
        %v1287 = vpop.f32.mrb[0].mxu0
        %1288 = vmatprep.mubr.bf16.mxu0 0
        %1289 = vmatmul.mubr.bf16.gmra.mrb[0].mxu0 %v1139
        %v1290 = vpop.f32.mrb[0].mxu0
        %v1291 = vadd.f32 %v1082, %v1290
        %v1292 = vpop.f32.mrb[0].mxu0
        %v1293 = vpop.f32.mrb[0].mxu0
        %v1294 = vadd.f32 %v1082, %v1293
        %v1295 = vpop.f32.mrb[0].mxu0
        %1296 = vmatprep.mubr.bf16.mxu0 0
        %1297 = vmatmul.mubr.bf16.gmra.mrb[0].mxu0 %v1142
        %v1298 = vpop.f32.mrb[0].mxu0
        %v1299 = vadd.f32 %v1082, %v1298
        %v1300 = vpop.f32.mrb[0].mxu0
        %v1301 = vpop.f32.mrb[0].mxu0
        %v1302 = vadd.f32 %v1082, %v1301
        %v1303 = vpop.f32.mrb[0].mxu0
        %1304 = vdwg.mxu0
        %v1305 = vmax.f32 %v1179, 0.0
        %v1306 = vmax.f32 %v1182, 0.0
        %v1307 = vmax.f32 %v1187, 0.0
        %v1308 = vmax.f32 %v1190, 0.0
        %v1309 = vmax.f32 %v1195, 0.0
        %v1310 = vmax.f32 %v1198, 0.0
        %v1311 = vmax.f32 %v1203, 0.0
        %v1312 = vmax.f32 %v1206, 0.0
        %v1313 = vmax.f32 %v1211, 0.0
        %v1314 = vmax.f32 %v1214, 0.0
        %v1315 = vmax.f32 %v1219, 0.0
        %v1316 = vmax.f32 %v1222, 0.0
        %v1317 = vmax.f32 %v1227, 0.0
        %v1318 = vmax.f32 %v1230, 0.0
        %v1319 = vmax.f32 %v1235, 0.0
        %v1320 = vmax.f32 %v1238, 0.0
        %v1321 = vmax.f32 %v1243, 0.0
        %v1322 = vmax.f32 %v1246, 0.0
        %v1323 = vmax.f32 %v1251, 0.0
        %v1324 = vmax.f32 %v1254, 0.0
        %v1325 = vmax.f32 %v1259, 0.0
        %v1326 = vmax.f32 %v1262, 0.0
        %v1327 = vmax.f32 %v1267, 0.0
        %v1328 = vmax.f32 %v1270, 0.0
        %v1329 = vmax.f32 %v1275, 0.0
        %v1330 = vmax.f32 %v1278, 0.0
        %v1331 = vmax.f32 %v1283, 0.0
        %v1332 = vmax.f32 %v1286, 0.0
        %v1333 = vmax.f32 %v1291, 0.0
        %v1334 = vmax.f32 %v1294, 0.0
        %v1335 = vmax.f32 %v1299, 0.0
        %v1336 = vmax.f32 %v1302, 0.0
        %v1337 = vsel %vm381, %v1305, 0.0
        %v1338 = vsel %vm381, %v1306, 0.0
        %v1339 = vadd.f32 %v1337, %v1338
        %v1340 = vsel %vm381, %v1307, 0.0
        %v1341 = vadd.f32 %v1339, %v1340
        %v1342 = vsel %vm381, %v1308, 0.0
        %v1343 = vadd.f32 %v1341, %v1342
        %v1344 = vrot.slane %v1343, 4
        %v1345 = vadd.f32 %v1343, %v1344
        %v1346 = vrot.slane %v1345, 2
        %v1347 = vadd.f32 %v1345, %v1346
        %v1348 = vrot.slane %v1347, 1
        %v1349 = vadd.f32 %v1347, %v1348
        %v1350 = vsel %vm381, %v1309, 0.0
        %v1351 = vsel %vm381, %v1310, 0.0
        %v1352 = vadd.f32 %v1350, %v1351
        %v1353 = vsel %vm381, %v1311, 0.0
        %v1354 = vadd.f32 %v1352, %v1353
        %v1355 = vsel %vm381, %v1312, 0.0
        %v1356 = vadd.f32 %v1354, %v1355
        %v1357 = vrot.slane %v1356, 4
        %v1358 = vadd.f32 %v1356, %v1357
        %v1359 = vrot.slane %v1358, 2
        %v1360 = vadd.f32 %v1358, %v1359
        %v1361 = vrot.slane %v1360, 1
        %v1362 = vadd.f32 %v1360, %v1361
        %v1363 = vsel %vm381, %v1313, 0.0
        %v1364 = vsel %vm381, %v1314, 0.0
        %v1365 = vadd.f32 %v1363, %v1364
        %v1366 = vsel %vm381, %v1315, 0.0
        %v1367 = vadd.f32 %v1365, %v1366
        %v1368 = vsel %vm381, %v1316, 0.0
        %v1369 = vadd.f32 %v1367, %v1368
        %v1370 = vrot.slane %v1369, 4
        %v1371 = vadd.f32 %v1369, %v1370
        %v1372 = vrot.slane %v1371, 2
        %v1373 = vadd.f32 %v1371, %v1372
        %v1374 = vrot.slane %v1373, 1
        %v1375 = vadd.f32 %v1373, %v1374
        %v1376 = vsel %vm381, %v1317, 0.0
        %v1377 = vsel %vm381, %v1318, 0.0
        %v1378 = vadd.f32 %v1376, %v1377
        %v1379 = vsel %vm381, %v1319, 0.0
        %v1380 = vadd.f32 %v1378, %v1379
        %v1381 = vsel %vm381, %v1320, 0.0
        %v1382 = vadd.f32 %v1380, %v1381
        %v1383 = vrot.slane %v1382, 4
        %v1384 = vadd.f32 %v1382, %v1383
        %v1385 = vrot.slane %v1384, 2
        %v1386 = vadd.f32 %v1384, %v1385
        %v1387 = vrot.slane %v1386, 1
        %v1388 = vadd.f32 %v1386, %v1387
        %v1389 = vsel %vm381, %v1321, 0.0
        %v1390 = vsel %vm381, %v1322, 0.0
        %v1391 = vadd.f32 %v1389, %v1390
        %v1392 = vsel %vm381, %v1323, 0.0
        %v1393 = vadd.f32 %v1391, %v1392
        %v1394 = vsel %vm381, %v1324, 0.0
        %v1395 = vadd.f32 %v1393, %v1394
        %v1396 = vrot.slane %v1395, 4
        %v1397 = vadd.f32 %v1395, %v1396
        %v1398 = vrot.slane %v1397, 2
        %v1399 = vadd.f32 %v1397, %v1398
        %v1400 = vrot.slane %v1399, 1
        %v1401 = vadd.f32 %v1399, %v1400
        %v1402 = vsel %vm381, %v1325, 0.0
        %v1403 = vsel %vm381, %v1326, 0.0
        %v1404 = vadd.f32 %v1402, %v1403
        %v1405 = vsel %vm381, %v1327, 0.0
        %v1406 = vadd.f32 %v1404, %v1405
        %v1407 = vsel %vm381, %v1328, 0.0
        %v1408 = vadd.f32 %v1406, %v1407
        %v1409 = vrot.slane %v1408, 4
        %v1410 = vadd.f32 %v1408, %v1409
        %v1411 = vrot.slane %v1410, 2
        %v1412 = vadd.f32 %v1410, %v1411
        %v1413 = vrot.slane %v1412, 1
        %v1414 = vadd.f32 %v1412, %v1413
        %v1415 = vsel %vm381, %v1329, 0.0
        %v1416 = vsel %vm381, %v1330, 0.0
        %v1417 = vadd.f32 %v1415, %v1416
        %v1418 = vsel %vm381, %v1331, 0.0
        %v1419 = vadd.f32 %v1417, %v1418
        %v1420 = vsel %vm381, %v1332, 0.0
        %v1421 = vadd.f32 %v1419, %v1420
        %v1422 = vrot.slane %v1421, 4
        %v1423 = vadd.f32 %v1421, %v1422
        %v1424 = vrot.slane %v1423, 2
        %v1425 = vadd.f32 %v1423, %v1424
        %v1426 = vrot.slane %v1425, 1
        %v1427 = vadd.f32 %v1425, %v1426
        %v1428 = vsel %vm381, %v1333, 0.0
        %v1429 = vsel %vm381, %v1334, 0.0
        %v1430 = vadd.f32 %v1428, %v1429
        %v1431 = vsel %vm381, %v1335, 0.0
        %v1432 = vadd.f32 %v1430, %v1431
        %v1433 = vsel %vm381, %v1336, 0.0
        %v1434 = vadd.f32 %v1432, %v1433
        %v1435 = vrot.slane %v1434, 4
        %v1436 = vadd.f32 %v1434, %v1435
        %v1437 = vrot.slane %v1436, 2
        %v1438 = vadd.f32 %v1436, %v1437
        %v1439 = vrot.slane %v1438, 1
        %v1440 = vadd.f32 %v1438, %v1439
        %v1441 = vmul.f32 %v1349, %v824
        %v1442 = vmul.f32 %v1362, %v824
        %v1443 = vmul.f32 %v1375, %v824
        %v1444 = vmul.f32 %v1388, %v824
        %v1445 = vmul.f32 %v1401, %v824
        %v1446 = vmul.f32 %v1414, %v824
        %v1447 = vmul.f32 %v1427, %v824
        %v1448 = vmul.f32 %v1440, %v824
        %v1449 = vsub.f32 %v1305, %v1441
        %v1450 = vsub.f32 %v1306, %v1441
        %v1451 = vsub.f32 %v1307, %v1441
        %v1452 = vsub.f32 %v1308, %v1441
        %v1453 = vsub.f32 %v1309, %v1442
        %v1454 = vsub.f32 %v1310, %v1442
        %v1455 = vsub.f32 %v1311, %v1442
        %v1456 = vsub.f32 %v1312, %v1442
        %v1457 = vsub.f32 %v1313, %v1443
        %v1458 = vsub.f32 %v1314, %v1443
        %v1459 = vsub.f32 %v1315, %v1443
        %v1460 = vsub.f32 %v1316, %v1443
        %v1461 = vsub.f32 %v1317, %v1444
        %v1462 = vsub.f32 %v1318, %v1444
        %v1463 = vsub.f32 %v1319, %v1444
        %v1464 = vsub.f32 %v1320, %v1444
        %v1465 = vsub.f32 %v1321, %v1445
        %v1466 = vsub.f32 %v1322, %v1445
        %v1467 = vsub.f32 %v1323, %v1445
        %v1468 = vsub.f32 %v1324, %v1445
        %v1469 = vsub.f32 %v1325, %v1446
        %v1470 = vsub.f32 %v1326, %v1446
        %v1471 = vsub.f32 %v1327, %v1446
        %v1472 = vsub.f32 %v1328, %v1446
        %v1473 = vsub.f32 %v1329, %v1447
        %v1474 = vsub.f32 %v1330, %v1447
        %v1475 = vsub.f32 %v1331, %v1447
        %v1476 = vsub.f32 %v1332, %v1447
        %v1477 = vsub.f32 %v1333, %v1448
        %v1478 = vsub.f32 %v1334, %v1448
        %v1479 = vsub.f32 %v1335, %v1448
        %v1480 = vsub.f32 %v1336, %v1448
        %v1481 = vmul.f32 %v1449, %v1449
        %v1482 = vmul.f32 %v1450, %v1450
        %v1483 = vmul.f32 %v1451, %v1451
        %v1484 = vmul.f32 %v1452, %v1452
        %v1485 = vmul.f32 %v1453, %v1453
        %v1486 = vmul.f32 %v1454, %v1454
        %v1487 = vmul.f32 %v1455, %v1455
        %v1488 = vmul.f32 %v1456, %v1456
        %v1489 = vmul.f32 %v1457, %v1457
        %v1490 = vmul.f32 %v1458, %v1458
        %v1491 = vmul.f32 %v1459, %v1459
        %v1492 = vmul.f32 %v1460, %v1460
        %v1493 = vmul.f32 %v1461, %v1461
        %v1494 = vmul.f32 %v1462, %v1462
        %v1495 = vmul.f32 %v1463, %v1463
        %v1496 = vmul.f32 %v1464, %v1464
        %v1497 = vmul.f32 %v1465, %v1465
        %v1498 = vmul.f32 %v1466, %v1466
        %v1499 = vmul.f32 %v1467, %v1467
        %v1500 = vmul.f32 %v1468, %v1468
        %v1501 = vmul.f32 %v1469, %v1469
        %v1502 = vmul.f32 %v1470, %v1470
        %v1503 = vmul.f32 %v1471, %v1471
        %v1504 = vmul.f32 %v1472, %v1472
        %v1505 = vmul.f32 %v1473, %v1473
        %v1506 = vmul.f32 %v1474, %v1474
        %v1507 = vmul.f32 %v1475, %v1475
        %v1508 = vmul.f32 %v1476, %v1476
        %v1509 = vmul.f32 %v1477, %v1477
        %v1510 = vmul.f32 %v1478, %v1478
        %v1511 = vmul.f32 %v1479, %v1479
        %v1512 = vmul.f32 %v1480, %v1480
        %v1513 = vsel %vm381, %v1481, 0.0
        %v1514 = vsel %vm381, %v1482, 0.0
        %v1515 = vadd.f32 %v1513, %v1514
        %v1516 = vsel %vm381, %v1483, 0.0
        %v1517 = vadd.f32 %v1515, %v1516
        %v1518 = vsel %vm381, %v1484, 0.0
        %v1519 = vadd.f32 %v1517, %v1518
        %v1520 = vrot.slane %v1519, 4
        %v1521 = vadd.f32 %v1519, %v1520
        %v1522 = vrot.slane %v1521, 2
        %v1523 = vadd.f32 %v1521, %v1522
        %v1524 = vrot.slane %v1523, 1
        %v1525 = vadd.f32 %v1523, %v1524
        %v1526 = vsel %vm381, %v1485, 0.0
        %v1527 = vsel %vm381, %v1486, 0.0
        %v1528 = vadd.f32 %v1526, %v1527
        %v1529 = vsel %vm381, %v1487, 0.0
        %v1530 = vadd.f32 %v1528, %v1529
        %v1531 = vsel %vm381, %v1488, 0.0
        %v1532 = vadd.f32 %v1530, %v1531
        %v1533 = vrot.slane %v1532, 4
        %v1534 = vadd.f32 %v1532, %v1533
        %v1535 = vrot.slane %v1534, 2
        %v1536 = vadd.f32 %v1534, %v1535
        %v1537 = vrot.slane %v1536, 1
        %v1538 = vadd.f32 %v1536, %v1537
        %v1539 = vsel %vm381, %v1489, 0.0
        %v1540 = vsel %vm381, %v1490, 0.0
        %v1541 = vadd.f32 %v1539, %v1540
        %v1542 = vsel %vm381, %v1491, 0.0
        %v1543 = vadd.f32 %v1541, %v1542
        %v1544 = vsel %vm381, %v1492, 0.0
        %v1545 = vadd.f32 %v1543, %v1544
        %v1546 = vrot.slane %v1545, 4
        %v1547 = vadd.f32 %v1545, %v1546
        %v1548 = vrot.slane %v1547, 2
        %v1549 = vadd.f32 %v1547, %v1548
        %v1550 = vrot.slane %v1549, 1
        %v1551 = vadd.f32 %v1549, %v1550
        %v1552 = vsel %vm381, %v1493, 0.0
        %v1553 = vsel %vm381, %v1494, 0.0
        %v1554 = vadd.f32 %v1552, %v1553
        %v1555 = vsel %vm381, %v1495, 0.0
        %v1556 = vadd.f32 %v1554, %v1555
        %v1557 = vsel %vm381, %v1496, 0.0
        %v1558 = vadd.f32 %v1556, %v1557
        %v1559 = vrot.slane %v1558, 4
        %v1560 = vadd.f32 %v1558, %v1559
        %v1561 = vrot.slane %v1560, 2
        %v1562 = vadd.f32 %v1560, %v1561
        %v1563 = vrot.slane %v1562, 1
        %v1564 = vadd.f32 %v1562, %v1563
        %v1565 = vsel %vm381, %v1497, 0.0
        %v1566 = vsel %vm381, %v1498, 0.0
        %v1567 = vadd.f32 %v1565, %v1566
        %v1568 = vsel %vm381, %v1499, 0.0
        %v1569 = vadd.f32 %v1567, %v1568
        %v1570 = vsel %vm381, %v1500, 0.0
        %v1571 = vadd.f32 %v1569, %v1570
        %v1572 = vrot.slane %v1571, 4
        %v1573 = vadd.f32 %v1571, %v1572
        %v1574 = vrot.slane %v1573, 2
        %v1575 = vadd.f32 %v1573, %v1574
        %v1576 = vrot.slane %v1575, 1
        %v1577 = vadd.f32 %v1575, %v1576
        %v1578 = vsel %vm381, %v1501, 0.0
        %v1579 = vsel %vm381, %v1502, 0.0
        %v1580 = vadd.f32 %v1578, %v1579
        %v1581 = vsel %vm381, %v1503, 0.0
        %v1582 = vadd.f32 %v1580, %v1581
        %v1583 = vsel %vm381, %v1504, 0.0
        %v1584 = vadd.f32 %v1582, %v1583
        %v1585 = vrot.slane %v1584, 4
        %v1586 = vadd.f32 %v1584, %v1585
        %v1587 = vrot.slane %v1586, 2
        %v1588 = vadd.f32 %v1586, %v1587
        %v1589 = vrot.slane %v1588, 1
        %v1590 = vadd.f32 %v1588, %v1589
        %v1591 = vsel %vm381, %v1505, 0.0
        %v1592 = vsel %vm381, %v1506, 0.0
        %v1593 = vadd.f32 %v1591, %v1592
        %v1594 = vsel %vm381, %v1507, 0.0
        %v1595 = vadd.f32 %v1593, %v1594
        %v1596 = vsel %vm381, %v1508, 0.0
        %v1597 = vadd.f32 %v1595, %v1596
        %v1598 = vrot.slane %v1597, 4
        %v1599 = vadd.f32 %v1597, %v1598
        %v1600 = vrot.slane %v1599, 2
        %v1601 = vadd.f32 %v1599, %v1600
        %v1602 = vrot.slane %v1601, 1
        %v1603 = vadd.f32 %v1601, %v1602
        %v1604 = vsel %vm381, %v1509, 0.0
        %v1605 = vsel %vm381, %v1510, 0.0
        %v1606 = vadd.f32 %v1604, %v1605
        %v1607 = vsel %vm381, %v1511, 0.0
        %v1608 = vadd.f32 %v1606, %v1607
        %v1609 = vsel %vm381, %v1512, 0.0
        %v1610 = vadd.f32 %v1608, %v1609
        %v1611 = vrot.slane %v1610, 4
        %v1612 = vadd.f32 %v1610, %v1611
        %v1613 = vrot.slane %v1612, 2
        %v1614 = vadd.f32 %v1612, %v1613
        %v1615 = vrot.slane %v1614, 1
        %v1616 = vadd.f32 %v1614, %v1615
        %v1617 = vmul.f32 %v1525, %v824
        %v1618 = vmul.f32 %v1538, %v824
        %v1619 = vmul.f32 %v1551, %v824
        %v1620 = vmul.f32 %v1564, %v824
        %v1621 = vmul.f32 %v1577, %v824
        %v1622 = vmul.f32 %v1590, %v824
        %v1623 = vmul.f32 %v1603, %v824
        %v1624 = vmul.f32 %v1616, %v824
        %v1625 = vadd.f32 %v1617, 1e-06
        %v1626 = vadd.f32 %v1618, 1e-06
        %v1627 = vadd.f32 %v1619, 1e-06
        %v1628 = vadd.f32 %v1620, 1e-06
        %v1629 = vadd.f32 %v1621, 1e-06
        %v1630 = vadd.f32 %v1622, 1e-06
        %v1631 = vadd.f32 %v1623, 1e-06
        %v1632 = vadd.f32 %v1624, 1e-06
        %v1633 = vrsqrt.pop %v1625
        %v1634 = vmul.f32 %v1625, %v1633
        %vm1635 = vcmp.eq.f32.partialorder %v1625, inf
        %v1636 = vsel %vm1635, %v1625, %v1634
        %vm1637 = vcmp.eq.f32.partialorder %v1625, 0.0
        %v1638 = vand.u32 %v1625, 2147483648
        %v1639 = vsel %vm1637, %v1638, %v1636
        %v1640 = vrsqrt.pop %v1626
        %v1641 = vmul.f32 %v1626, %v1640
        %vm1642 = vcmp.eq.f32.partialorder %v1626, inf
        %v1643 = vsel %vm1642, %v1626, %v1641
        %vm1644 = vcmp.eq.f32.partialorder %v1626, 0.0
        %v1645 = vand.u32 %v1626, 2147483648
        %v1646 = vsel %vm1644, %v1645, %v1643
        %v1647 = vrsqrt.pop %v1627
        %v1648 = vmul.f32 %v1627, %v1647
        %vm1649 = vcmp.eq.f32.partialorder %v1627, inf
        %v1650 = vsel %vm1649, %v1627, %v1648
        %vm1651 = vcmp.eq.f32.partialorder %v1627, 0.0
        %v1652 = vand.u32 %v1627, 2147483648
        %v1653 = vsel %vm1651, %v1652, %v1650
        %v1654 = vrsqrt.pop %v1628
        %v1655 = vmul.f32 %v1628, %v1654
        %vm1656 = vcmp.eq.f32.partialorder %v1628, inf
        %v1657 = vsel %vm1656, %v1628, %v1655
        %vm1658 = vcmp.eq.f32.partialorder %v1628, 0.0
        %v1659 = vand.u32 %v1628, 2147483648
        %v1660 = vsel %vm1658, %v1659, %v1657
        %v1661 = vrsqrt.pop %v1629
        %v1662 = vmul.f32 %v1629, %v1661
        %vm1663 = vcmp.eq.f32.partialorder %v1629, inf
        %v1664 = vsel %vm1663, %v1629, %v1662
        %vm1665 = vcmp.eq.f32.partialorder %v1629, 0.0
        %v1666 = vand.u32 %v1629, 2147483648
        %v1667 = vsel %vm1665, %v1666, %v1664
        %v1668 = vrsqrt.pop %v1630
        %v1669 = vmul.f32 %v1630, %v1668
        %vm1670 = vcmp.eq.f32.partialorder %v1630, inf
        %v1671 = vsel %vm1670, %v1630, %v1669
        %vm1672 = vcmp.eq.f32.partialorder %v1630, 0.0
        %v1673 = vand.u32 %v1630, 2147483648
        %v1674 = vsel %vm1672, %v1673, %v1671
        %v1675 = vrsqrt.pop %v1631
        %v1676 = vmul.f32 %v1631, %v1675
        %vm1677 = vcmp.eq.f32.partialorder %v1631, inf
        %v1678 = vsel %vm1677, %v1631, %v1676
        %vm1679 = vcmp.eq.f32.partialorder %v1631, 0.0
        %v1680 = vand.u32 %v1631, 2147483648
        %v1681 = vsel %vm1679, %v1680, %v1678
        %v1682 = vrsqrt.pop %v1632
        %v1683 = vmul.f32 %v1632, %v1682
        %vm1684 = vcmp.eq.f32.partialorder %v1632, inf
        %v1685 = vsel %vm1684, %v1632, %v1683
        %vm1686 = vcmp.eq.f32.partialorder %v1632, 0.0
        %v1687 = vand.u32 %v1632, 2147483648
        %v1688 = vsel %vm1686, %v1687, %v1685
        %v1689 = vpack.c.bf16 %v1441, %v1441
        %v1690 = vpack.c.bf16 %v1442, %v1442
        %v1691 = vpack.c.bf16 %v1443, %v1443
        %v1692 = vpack.c.bf16 %v1444, %v1444
        %v1693 = vpack.c.bf16 %v1445, %v1445
        %v1694 = vpack.c.bf16 %v1446, %v1446
        %v1695 = vpack.c.bf16 %v1447, %v1447
        %v1696 = vpack.c.bf16 %v1448, %v1448
        %v1697 = vpack.c.bf16 %v1639, %v1639
        %v1698 = vpack.c.bf16 %v1646, %v1646
        %v1699 = vpack.c.bf16 %v1653, %v1653
        %v1700 = vpack.c.bf16 %v1660, %v1660
        %v1701 = vpack.c.bf16 %v1667, %v1667
        %v1702 = vpack.c.bf16 %v1674, %v1674
        %v1703 = vpack.c.bf16 %v1681, %v1681
        %v1704 = vpack.c.bf16 %v1688, %v1688
        %v1705 = vld [vmem:[%s4] sm:$0xf]
        %v1706 = vld [vmem:[%s4 + $0x4] sm:$0xf]
        %v1707 = vld [vmem:[%s4 + $0x8] sm:$0xf]
        %v1708 = vld [vmem:[%s4 + $0xc] sm:$0xf]
        %v1709 = vld [vmem:[%s4 + $0x10] sm:$0xf]
        %v1710 = vld [vmem:[%s4 + $0x14] sm:$0xf]
        %v1711 = vld [vmem:[%s4 + $0x18] sm:$0xf]
        %v1712 = vld [vmem:[%s4 + $0x1c] sm:$0xf]
        %v1713 = vld [vmem:[%s5] sm:$0xf]
        %v1714 = vld [vmem:[%s5 + $0x4] sm:$0xf]
        %v1715 = vld [vmem:[%s5 + $0x8] sm:$0xf]
        %v1716 = vld [vmem:[%s5 + $0xc] sm:$0xf]
        %v1717 = vld [vmem:[%s5 + $0x10] sm:$0xf]
        %v1718 = vld [vmem:[%s5 + $0x14] sm:$0xf]
        %v1719 = vld [vmem:[%s5 + $0x18] sm:$0xf]
        %v1720 = vld [vmem:[%s5 + $0x1c] sm:$0xf]
        %v1729 = vunpack.c.l.b16 %v1697
        %v1730 = vunpack.c.l.b16 %v1698
        %v1731 = vunpack.c.l.b16 %v1699
        %v1732 = vunpack.c.l.b16 %v1700
        %v1733 = vunpack.c.l.b16 %v1701
        %v1734 = vunpack.c.l.b16 %v1702
        %v1735 = vunpack.c.l.b16 %v1703
        %v1736 = vunpack.c.l.b16 %v1704
        %vm1737 = vcmask 1041409
        %v1738 = vsel %vm1737, %v1730, %v1729
        %vm1739 = vcmask 1042434
        %v1740 = vsel %vm1739, %v1731, %v1738
        %vm1741 = vcmask 1043459
        %v1742 = vsel %vm1741, %v1732, %v1740
        %vm1743 = vcmask 1044484
        %v1744 = vsel %vm1743, %v1733, %v1742
        %vm1745 = vcmask 1045509
        %v1746 = vsel %vm1745, %v1734, %v1744
        %vm1747 = vcmask 1046534
        %v1748 = vsel %vm1747, %v1735, %v1746
        %vm1749 = vcmask 1047559
        %v1750 = vsel %vm1749, %v1736, %v1748
        %v1751 = vpack.c.b16 %v1750, %v1750
        %v1760 = vunpack.c.l.b16 %v1713
        %v1761 = vunpack.c.l.b16 %v1714
        %v1762 = vunpack.c.l.b16 %v1715
        %v1763 = vunpack.c.l.b16 %v1716
        %v1764 = vunpack.c.l.b16 %v1717
        %v1765 = vunpack.c.l.b16 %v1718
        %v1766 = vunpack.c.l.b16 %v1719
        %v1767 = vunpack.c.l.b16 %v1720
        %v1768 = vpack.c.b16 %v1761, %v1760
        %v1769 = vpack.c.b16 %v1763, %v1762
        %v1770 = vpack.c.b16 %v1765, %v1764
        %v1771 = vpack.c.b16 %v1767, %v1766
        %v1777 = vsel %vm381, %v1751, 0
        %1779 = vmatprep.subr.bf16.mxu0 0
        %1780 = vmatpush1.bf16.msra.mxu0 %v1768
        %1781 = vmatprep.subr.bf16.mxu0 0
        %1782 = vmatpush1.bf16.msra.mxu0 %v1769
        %1783 = vmatprep.subr.bf16.mxu0 0
        %1784 = vmatpush1.bf16.msra.mxu0 %v1770
        %1785 = vmatprep.subr.bf16.mxu0 0
        %1786 = vmatpush1.bf16.msra.mxu0 %v1771
        %1787 = vmatprep.subr.bf16.mxu0 0
        %1788 = vmatpush1.bf16.msra.mxu0 0
        %1789 = vmatprep.subr.bf16.mxu0 0
        %1790 = vmatpush1.bf16.msra.mxu0 0
        %1791 = vmatprep.subr.bf16.mxu0 0
        %1792 = vmatpush1.bf16.msra.mxu0 0
        %1793 = vmatprep.subr.bf16.mxu0 0
        %1794 = vmatpush1.bf16.msra.mxu0 0
        %1795 = vmatprep.subr.bf16.mxu0 0
        %1796 = vmatpush1.bf16.msra.mxu0 0
        %1797 = vmatprep.subr.bf16.mxu0 0
        %1798 = vmatpush1.bf16.msra.mxu0 0
        %1799 = vmatprep.subr.bf16.mxu0 0
        %1800 = vmatpush1.bf16.msra.mxu0 0
        %1801 = vmatprep.subr.bf16.mxu0 0
        %1802 = vmatpush1.bf16.msra.mxu0 0
        %1803 = vmatprep.subr.bf16.mxu0 0
        %1804 = vmatpush1.bf16.msra.mxu0 0
        %1805 = vmatprep.subr.bf16.mxu0 0
        %1806 = vmatpush1.bf16.msra.mxu0 0
        %1807 = vmatprep.subr.bf16.mxu0 0
        %1808 = vmatpush1.bf16.msra.mxu0 0
        %1809 = vmatprep.subr.bf16.mxu0 0
        %1810 = vmatpush1.bf16.msra.mxu0 0
        %1811 = vmatprep.mubr.bf16.mxu0 0
        %1812 = vmatmul.mubr.bf16.gmra.mrb[0].mxu0 %v1777
        %v1813 = vpop.f32.mrb[0].mxu0
        %v1814 = vadd.f32 0.0, %v1813
        %v1815 = vpop.f32.mrb[0].mxu0
        %v1816 = vpop.f32.mrb[0].mxu0
        %v1817 = vpop.f32.mrb[0].mxu0
        %1818 = vdwg.mxu0
        %v1827 = vunpack.c.l.b16 %v1689
        %v1828 = vunpack.c.l.b16 %v1690
        %v1829 = vunpack.c.l.b16 %v1691
        %v1830 = vunpack.c.l.b16 %v1692
        %v1831 = vunpack.c.l.b16 %v1693
        %v1832 = vunpack.c.l.b16 %v1694
        %v1833 = vunpack.c.l.b16 %v1695
        %v1834 = vunpack.c.l.b16 %v1696
        %v1835 = vsel %vm1737, %v1828, %v1827
        %v1836 = vsel %vm1739, %v1829, %v1835
        %v1837 = vsel %vm1741, %v1830, %v1836
        %v1838 = vsel %vm1743, %v1831, %v1837
        %v1839 = vsel %vm1745, %v1832, %v1838
        %v1840 = vsel %vm1747, %v1833, %v1839
        %v1841 = vsel %vm1749, %v1834, %v1840
        %v1842 = vpack.c.b16 %v1841, %v1841
        %v1851 = vunpack.c.l.b16 %v1705
        %v1852 = vunpack.c.l.b16 %v1706
        %v1853 = vunpack.c.l.b16 %v1707
        %v1854 = vunpack.c.l.b16 %v1708
        %v1855 = vunpack.c.l.b16 %v1709
        %v1856 = vunpack.c.l.b16 %v1710
        %v1857 = vunpack.c.l.b16 %v1711
        %v1858 = vunpack.c.l.b16 %v1712
        %v1859 = vpack.c.b16 %v1852, %v1851
        %v1860 = vpack.c.b16 %v1854, %v1853
        %v1861 = vpack.c.b16 %v1856, %v1855
        %v1862 = vpack.c.b16 %v1858, %v1857
        %v1868 = vsel %vm381, %v1842, 0
        %1870 = vmatprep.subr.bf16.mxu0 0
        %1871 = vmatpush1.bf16.msra.mxu0 %v1859
        %1872 = vmatprep.subr.bf16.mxu0 0
        %1873 = vmatpush1.bf16.msra.mxu0 %v1860
        %1874 = vmatprep.subr.bf16.mxu0 0
        %1875 = vmatpush1.bf16.msra.mxu0 %v1861
        %1876 = vmatprep.subr.bf16.mxu0 0
        %1877 = vmatpush1.bf16.msra.mxu0 %v1862
        %1878 = vmatprep.subr.bf16.mxu0 0
        %1879 = vmatpush1.bf16.msra.mxu0 0
        %1880 = vmatprep.subr.bf16.mxu0 0
        %1881 = vmatpush1.bf16.msra.mxu0 0
        %1882 = vmatprep.subr.bf16.mxu0 0
        %1883 = vmatpush1.bf16.msra.mxu0 0
        %1884 = vmatprep.subr.bf16.mxu0 0
        %1885 = vmatpush1.bf16.msra.mxu0 0
        %1886 = vmatprep.subr.bf16.mxu0 0
        %1887 = vmatpush1.bf16.msra.mxu0 0
        %1888 = vmatprep.subr.bf16.mxu0 0
        %1889 = vmatpush1.bf16.msra.mxu0 0
        %1890 = vmatprep.subr.bf16.mxu0 0
        %1891 = vmatpush1.bf16.msra.mxu0 0
        %1892 = vmatprep.subr.bf16.mxu0 0
        %1893 = vmatpush1.bf16.msra.mxu0 0
        %1894 = vmatprep.subr.bf16.mxu0 0
        %1895 = vmatpush1.bf16.msra.mxu0 0
        %1896 = vmatprep.subr.bf16.mxu0 0
        %1897 = vmatpush1.bf16.msra.mxu0 0
        %1898 = vmatprep.subr.bf16.mxu0 0
        %1899 = vmatpush1.bf16.msra.mxu0 0
        %1900 = vmatprep.subr.bf16.mxu0 0
        %1901 = vmatpush1.bf16.msra.mxu0 0
        %1902 = vmatprep.mubr.bf16.mxu0 0
        %1903 = vmatmul.mubr.bf16.gmra.mrb[0].mxu0 %v1868
        %v1904 = vpop.f32.mrb[0].mxu0
        %v1905 = vadd.f32 %v1814, %v1904
        %v1906 = vpop.f32.mrb[0].mxu0
        %v1907 = vpop.f32.mrb[0].mxu0
        %v1908 = vpop.f32.mrb[0].mxu0
        %1909 = vdwg.mxu0
        %v1910 = vld [vmem:[%s6] sm:$0x1]
        %v1912 = vlaneseq
        %v1913 = vshrl.u32 %v1912, 7
        %v1914 = vsub.s32 0, %v1913
        %v1915 = vrot.slane %v1910, %v1914
        %v1917 = vadd.f32 %v1905, %v1915
        %v1919 = vcombine.high %v1917, %v1917
        %v1921 = vunpack.c.l.s4 1966171168
        %v1922 = vunpack.c.0.s8 %v1921
        %v1923 = vlaneseq
        %v1924 = vshrl.u32 %v1923, 7
        %v1925 = vsub.s32 %v1922, %v1924
        %v1926 = vrot.slane %v1917, %v1925
        %v1928 = vunpack.c.l.s4 1966171168
        %v1929 = vunpack.c.0.s8 %v1928
        %v1930 = vlaneseq
        %v1931 = vshrl.u32 %v1930, 7
        %v1932 = vsub.s32 %v1929, %v1931
        %v1933 = vrot.slane %v1919, %v1932
        %v1934 = vcombine.high %v1926, %v1926
        %v1935 = vcombine.high %v1933, %v1933
        %v1937 = vunpack.c.l.s4 1966171168
        %v1938 = vunpack.c.0.s8 %v1937
        %v1939 = vlaneseq
        %v1940 = vshrl.u32 %v1939, 7
        %v1941 = vsub.s32 %v1938, %v1940
        %v1942 = vrot.slane %v1926, %v1941
        %v1944 = vunpack.c.l.s4 1966171168
        %v1945 = vunpack.c.0.s8 %v1944
        %v1946 = vlaneseq
        %v1947 = vshrl.u32 %v1946, 7
        %v1948 = vsub.s32 %v1945, %v1947
        %v1949 = vrot.slane %v1933, %v1948
        %v1951 = vunpack.c.l.s4 1966171168
        %v1952 = vunpack.c.0.s8 %v1951
        %v1953 = vlaneseq
        %v1954 = vshrl.u32 %v1953, 7
        %v1955 = vsub.s32 %v1952, %v1954
        %v1956 = vrot.slane %v1934, %v1955
        %v1958 = vunpack.c.l.s4 1966171168
        %v1959 = vunpack.c.0.s8 %v1958
        %v1960 = vlaneseq
        %v1961 = vshrl.u32 %v1960, 7
        %v1962 = vsub.s32 %v1959, %v1961
        %v1963 = vrot.slane %v1935, %v1962
        %v1964 = vcombine.high %v1942, %v1942
        %v1965 = vcombine.high %v1949, %v1949
        %v1966 = vcombine.high %v1956, %v1956
        %v1967 = vcombine.high %v1963, %v1963
        %vm1976 = vcmask 253952
        %1977 = vst.msk [vmem:[%s297] sm:$0x1] %vm1976, %v1942
        %1978 = vst.msk [vmem:[%s297 + $0x1] sm:$0x1] %vm1976, %v1956
        %1979 = vst.msk [vmem:[%s297 + $0x2] sm:$0x1] %vm1976, %v1964
        %1980 = vst.msk [vmem:[%s297 + $0x3] sm:$0x1] %vm1976, %v1966
        %1981 = vst.msk [vmem:[%s297 + $0x4] sm:$0x1] %vm1976, %v1949
        %1982 = vst.msk [vmem:[%s297 + $0x5] sm:$0x1] %vm1976, %v1963
        %1983 = vst.msk [vmem:[%s297 + $0x6] sm:$0x1] %vm1976, %v1965
        %1984 = vst.msk [vmem:[%s297 + $0x7] sm:$0x1] %vm1976, %v1967
        %s1985 = sand.u32 %s184, 1
        %s1986 = scalar_lea.sflag [#allocation4], %s1985
        %s1987 = sand.u32 %s184, 1
        %s1988 = smul.addr %s1987, 8
        %s1989 = scalar_lea.vmem [#allocation5], %s1988
        // Predicated region
        $region53: #{tpu_custom_call.1} parent=47 // pred_check
          %p1990 = pneg %p194
        $region54: #{tpu_custom_call.1} parent=47 // pred_check_branch
          %1992 = sbr.rel (%p1990) target = $region56
        $region55: #{tpu_custom_call.1} parent=47 // pred_region
          %s1993 = smul.u32 8, %s24
          %s1995 = ssub.s32 128, 128
          %1996 = vsyncadd %s1986, %s1995
          %s1997 = smul.addr %s1993, 16
          %s1998 = scalar_lea.hbm %s7, %s1997
          %s1999 = sshll.u32 %s1989, 4
          %s2000 = int_to_ptr.vmem [resolvable:$true] %s1999
          %2005 = dma.vmem_to_hbm [thread:$0]  %s2000, 128, %s1998, %s1986, 16, 16, 1
        $region56: #{tpu_custom_call.1} parent=47 // pred_fallthru
          _
      $region48: #{tpu_custom_call.1} parent=5 // pred_fallthru
        _
      %p2006 = scmp.le.s32.totalorder 2, %s19
      // Predicated region
      $region57: #{tpu_custom_call.1} parent=5 // pred_check
        %p2007 = pneg %p2006
      $region58: #{tpu_custom_call.1} parent=5 // pred_check_branch
        %2009 = sbr.rel (%p2007) target = $region60
      $region59: #{tpu_custom_call.1} parent=5 // pred_region
        %s2010 = ssub.s32 %s19, 2
        // Predicated region
        $region61: #{tpu_custom_call.1} parent=59 // pred_check
          %p2011 = pneg %p200
        $region62: #{tpu_custom_call.1} parent=59 // pred_check_branch
          %2013 = sbr.rel (%p2011) target = $region64
        $region63: #{tpu_custom_call.1} parent=59 // pred_region
          %s2014 = sand.u32 %s185, 1
          %s2015 = scalar_lea.sflag [#allocation4], %s2014
          %s2016 = sand.u32 %s185, 1
          %s2017 = smul.addr %s2016, 8
          %s2018 = scalar_lea.vmem [#allocation5], %s2017
          %2019 = dma.done %s2015, 128
        $region64: #{tpu_custom_call.1} parent=59 // pred_fallthru
          _
      $region60: #{tpu_custom_call.1} parent=5 // pred_fallthru
        _
    $region6: #{tpu_custom_call.1} parent=1 // loop_footer
      %s23 = sadd.s32 1, %s19
    $region7: #{tpu_custom_call.1} parent=1 // loop_footer_branch
      %18 = sbr.rel target = $region3
    $region8: #{tpu_custom_call.1} parent=1 // loop_exit
      _
    %2020 = vsyncpa [#allocation3], 1
    %s2021 = scalar_lea.sflag [#allocation3], 1
    %2022 = vsyncpa %s2021, 1
    %2023 = vsyncpa [#allocation4], 1
    %s2024 = scalar_lea.sflag [#allocation4], 1
    %2025 = vsyncpa %s2024, 1

</llo_original>
